<compile_context>
chip_gen: v7x
topology: tpu7x:2x2x1
jax: 0.10.0
libtpu: 0.0.40
codegen_flags: <defaults>
</compile_context>

<pallas_src>
import functools

import jax
import jax.numpy as jnp
from jax.experimental import pallas as pl
from jax.experimental.pallas import tpu as pltpu

_LANE = 128


def _round_up(v, m):
    return ((v + m - 1) // m) * m


def _cdiv(a, b):
    return -(-a // b)


def _diffusion_gcn_kernel(w_ref,      # SMEM (k+1,)      diffusion coefficients
                          x_ref,      # VMEM (G, Np, Fp) bf16
                          A_ref,      # VMEM (G, Np, Np) bf16 normalized adjacency
                          W1_ref,     # VMEM (Fp, Hp)    bf16
                          b1_ref,     # VMEM (1, Hp)     f32
                          W2_ref,     # VMEM (Hp, Hp)    bf16
                          b2_ref,     # VMEM (1, Hp)     f32
                          W3_ref,     # VMEM (Hp, Cp)    bf16
                          b3_ref,     # VMEM (1, Cp)     f32
                          out_ref,    # VMEM (G, Np, Cp) f32
                          *,
                          k: int,
                          num_classes: int):
    G, Np, Fp = x_ref.shape
    Hp = W1_ref.shape[1]
    Cp = W3_ref.shape[1]
    cd = A_ref.dtype                                  # bf16 compute dtype

    # Hoist SMEM scalar reads once for the whole kernel.
    coeffs = [w_ref[i] for i in range(k + 1)]

    A = A_ref[...]                                    # (G, Np, Np) bf16

    # ---- Precompute the diffusion polynomial M = w0*I + sum_i w_i * A^i ----
    # Accumulate in f32, cast to bf16 exactly once (faster + more accurate than
    # k serial hops with per-hop recasts of h).
    row = jax.lax.broadcasted_iota(jnp.int32, (Np, Np), 0)
    col = jax.lax.broadcasted_iota(jnp.int32, (Np, Np), 1)
    eye = (row == col).astype(jnp.float32)            # (Np, Np)
    M = jnp.broadcast_to(coeffs[0] * eye, (G, Np, Np))

    P_f32 = A.astype(jnp.float32)                     # A^1
    for i in range(1, k + 1):
        M = M + coeffs[i] * P_f32
        if i < k:
            P_f32 = jnp.einsum('gij,gjk->gik', P_f32.astype(cd), A,
                               preferred_element_type=jnp.float32)
    M = M.astype(cd)                                  # single cast, (G, Np, Np)

    def conv(h):                                      # h: (G, Np, X) f32
        return jnp.einsum('gij,gjh->gih', M, h.astype(cd),
                          preferred_element_type=jnp.float32)

    def fc(h, W_ref, b_ref):                          # fused over the G graphs
        h2 = h.reshape(G * Np, h.shape[-1]).astype(cd)
        y = jnp.dot(h2, W_ref[...],
                    preferred_element_type=jnp.float32) + b_ref[...]
        return y.reshape(G, Np, y.shape[-1])

    # fc1 -> diffusion conv -> relu
    h = jnp.maximum(conv(fc(x_ref[...], W1_ref, b1_ref)), 0.0)
    # fc2 -> diffusion conv -> relu
    h = jnp.maximum(conv(fc(h, W2_ref, b2_ref)), 0.0)
    # fc3 -> log_softmax over the real (unpadded) class lanes only
    logits = fc(h, W3_ref, b3_ref)                    # (G, Np, Cp) f32
    lane = jax.lax.broadcasted_iota(jnp.int32, logits.shape, dimension=2)
    logits = jnp.where(lane < num_classes, logits, -1e30)

    m = jnp.max(logits, axis=-1, keepdims=True)
    z = logits - m
    lse = jnp.log(jnp.sum(jnp.exp(z), axis=-1, keepdims=True))
    out_ref[...] = z - lse


def diffusion_gcn_forward_batched(x, A, params, k=2):
    """Batched forward. x: [B, N, Fin] f32, A: [B, N, N] f32 dense normalized adjacency."""
    B, N, Fin = x.shape
    H = params["W1"].shape[1]
    C = params["W3"].shape[1]

    Np = _round_up(N, _LANE)      # full lane width -> lane/sublane-dense bf16 tiles
    Fp = _round_up(Fin, _LANE)
    Hp = _round_up(H, _LANE)
    Cp = _round_up(C, _LANE)

    # Graphs per grid step: fill the MXU M dimension (G*Np >= 256), but keep
    # >= 2 parallel grid steps when B >= 2 so v7x's two TensorCores both work.
    G = max(1, _cdiv(256, Np))
    G = min(G, B)
    if B >= 2:
        G = max(1, min(G, _cdiv(B, 2)))
    Bp = _cdiv(B, G) * G

    cd = jnp.bfloat16   # MXU-native dtype on v5e/v6e/v7x; accumulate in f32.

    pad2 = lambda a, r, c: jnp.pad(a, ((0, r - a.shape[0]), (0, c - a.shape[1])))

    xp = jnp.pad(x, ((0, Bp - B), (0, Np - N), (0, Fp - Fin))).astype(cd)
    Ap = jnp.pad(A, ((0, Bp - B), (0, Np - N), (0, Np - N))).astype(cd)
    W1 = pad2(params["W1"], Fp, Hp).astype(cd)
    W2 = pad2(params["W2"], Hp, Hp).astype(cd)
    W3 = pad2(params["W3"], Hp, Cp).astype(cd)
    b1 = pad2(params["b1"], 1, Hp).astype(jnp.float32)
    b2 = pad2(params["b2"], 1, Hp).astype(jnp.float32)
    b3 = pad2(params["b3"], 1, Cp).astype(jnp.float32)
    w = params["w"].astype(jnp.float32)

    kernel = functools.partial(_diffusion_gcn_kernel, k=k, num_classes=C)

    # Advisory cost estimate (padded shapes): polynomial build + 2 convs + 3 fcs.
    flops = Bp * (2 * (k - 1) * Np * Np * Np          # A powers
                  + 2 * 2 * Np * Np * Hp              # two conv applications
                  + 2 * Np * Fp * Hp
                  + 2 * Np * Hp * Hp
                  + 2 * Np * Hp * Cp)
    bytes_accessed = (xp.size * 2 + Ap.size * 2
                      + (W1.size + W2.size + W3.size) * 2
                      + (b1.size + b2.size + b3.size + w.size) * 4
                      + Bp * Np * Cp * 4)
    cost = pl.CostEstimate(flops=flops,
                           transcendentals=Bp * Np * Cp,
                           bytes_accessed=bytes_accessed)

    smem = pl.BlockSpec(memory_space=pltpu.MemorySpace.SMEM)

    out_padded = pl.pallas_call(
        kernel,
        out_shape=jax.ShapeDtypeStruct((Bp, Np, Cp), jnp.float32),
        grid=(Bp // G,),
        in_specs=[
            smem,                                              # w coefficients
            pl.BlockSpec((G, Np, Fp), lambda b: (b, 0, 0)),    # x (G graphs)
            pl.BlockSpec((G, Np, Np), lambda b: (b, 0, 0)),    # A (G graphs)
            pl.BlockSpec((Fp, Hp), lambda b: (0, 0)),          # W1 (shared)
            pl.BlockSpec((1, Hp), lambda b: (0, 0)),           # b1
            pl.BlockSpec((Hp, Hp), lambda b: (0, 0)),          # W2
            pl.BlockSpec((1, Hp), lambda b: (0, 0)),           # b2
            pl.BlockSpec((Hp, Cp), lambda b: (0, 0)),          # W3
            pl.BlockSpec((1, Cp), lambda b: (0, 0)),           # b3
        ],
        out_specs=pl.BlockSpec((G, Np, Cp), lambda b: (b, 0, 0)),
        compiler_params=pltpu.CompilerParams(
            dimension_semantics=("parallel",)),
        cost_estimate=cost,
    )(w, xp, Ap, W1, b1, W2, b2, W3, b3)

    # Strip graph / node / class padding outside the kernel (lane-dense store inside).
    return out_padded[:B, :N, :C]


def diffusion_gcn_forward(x, A, params, k=2):
    """Single-graph forward matching diffusionGCN.forward: x [N, Fin]."""
    return diffusion_gcn_forward_batched(x[None], A[None], params, k=k)[0]


def _reference_forward(x, A, params, k=2):
    def conv(h):
        y = params["w"][0] * h
        for i in range(1, k + 1):
            h = A @ h
            y = y + params["w"][i] * h
        return y

    h = jax.nn.relu(conv(x @ params["W1"] + params["b1"]))
    h = jax.nn.relu(conv(h @ params["W2"] + params["b2"]))
    return jax.nn.log_softmax(h @ params["W3"] + params["b3"], axis=1)


def _make_normalized_adjacency(key, n):
    # Symmetric random 0/1 adjacency + self loops, then D^-1/2 (W + I) D^-1/2.
    raw = jax.random.bernoulli(key, 0.15, (n, n)).astype(jnp.float32)
    adj = jnp.maximum(raw, raw.T)
    adj = adj * (1.0 - jnp.eye(n, dtype=jnp.float32))
    H = adj + jnp.eye(n, dtype=jnp.float32)
    deg = jnp.sum(H, axis=1)
    d_inv_sqrt = 1.0 / jnp.sqrt(deg)
    return (d_inv_sqrt[:, None] * H) * d_inv_sqrt[None, :]


if __name__ == "__main__":
    key = jax.random.PRNGKey(0)
    # Karate-club-like sizes: 34 nodes, 16 input features, 30 hidden, 4 classes.
    B, N, Fin, Hdim, C, k = 2, 34, 16, 30, 4, 2

    keys = jax.random.split(key, 12)
    xs = jax.random.normal(keys[0], (B, N, Fin), dtype=jnp.float32)
    As = jnp.stack([_make_normalized_adjacency(keys[1 + b], N) for b in range(B)])

    # Linear weights kept as [in, out] (torch weight.T); biases broadcast as [1, out].
    params = {
        "W1": 0.1 * jax.random.normal(keys[4], (Fin, Hdim), dtype=jnp.float32),
        "b1": 0.1 * jax.random.normal(keys[5], (1, Hdim), dtype=jnp.float32),
        "W2": 0.1 * jax.random.normal(keys[6], (Hdim, Hdim), dtype=jnp.float32),
        "b2": 0.1 * jax.random.normal(keys[7], (1, Hdim), dtype=jnp.float32),
        "W3": 0.1 * jax.random.normal(keys[8], (Hdim, C), dtype=jnp.float32),
        "b3": 0.1 * jax.random.normal(keys[9], (1, C), dtype=jnp.float32),
        "w": jax.random.normal(keys[10], (k + 1,), dtype=jnp.float32),
    }

    out = diffusion_gcn_forward_batched(xs, As, params, k=k)
    out = jax.block_until_ready(out)
    assert out.shape == (B, N, C)

    # Compare each graph against the pure-JAX f32 reference (bf16 matmuls in the
    # kernel -> loosened tolerance).
    for b in range(B):
        ref = _reference_forward(xs[b], As[b], params, k=k)
        assert jnp.allclose(out[b], ref, atol=5e-2, rtol=5e-2), (
            "max abs diff", float(jnp.max(jnp.abs(out[b] - ref))))

    print("KERNEL_OK")
</pallas_src>

<mosaic_0001>
module attributes {stable_mosaic.version = 11 : i64} {
  func.func @_diffusion_gcn_kernel(%arg0: i32, %arg1: memref<3xf32, #tpu.memory_space<smem>>, %arg2: memref<1x128x128xbf16, #tpu.memory_space<vmem>>, %arg3: memref<1x128x128xbf16, #tpu.memory_space<vmem>>, %arg4: memref<128x128xbf16, #tpu.memory_space<vmem>>, %arg5: memref<1x128xf32, #tpu.memory_space<vmem>>, %arg6: memref<128x128xbf16, #tpu.memory_space<vmem>>, %arg7: memref<1x128xf32, #tpu.memory_space<vmem>>, %arg8: memref<128x128xbf16, #tpu.memory_space<vmem>>, %arg9: memref<1x128xf32, #tpu.memory_space<vmem>>, %arg10: memref<1x128x128xf32, #tpu.memory_space<vmem>>) attributes {dimension_semantics = [#tpu.dimension_semantics<parallel>], iteration_bounds = array<i64: 2>, scalar_prefetch = 0 : i64, scratch_operands = 0 : i64, tpu.core_type = #tpu.core_type<tc>, window_params = [{transform_indices = @transform_0, window_bounds = array<i64: 3>}, {transform_indices = @transform_1, window_bounds = array<i64: 1, 128, 128>}, {transform_indices = @transform_2, window_bounds = array<i64: 1, 128, 128>}, {pipeline_mode = #tpu.pipeline_mode<synchronous>, transform_indices = @transform_3, window_bounds = array<i64: 128, 128>}, {pipeline_mode = #tpu.pipeline_mode<synchronous>, transform_indices = @transform_4, window_bounds = array<i64: 1, 128>}, {pipeline_mode = #tpu.pipeline_mode<synchronous>, transform_indices = @transform_5, window_bounds = array<i64: 128, 128>}, {pipeline_mode = #tpu.pipeline_mode<synchronous>, transform_indices = @transform_6, window_bounds = array<i64: 1, 128>}, {pipeline_mode = #tpu.pipeline_mode<synchronous>, transform_indices = @transform_7, window_bounds = array<i64: 128, 128>}, {pipeline_mode = #tpu.pipeline_mode<synchronous>, transform_indices = @transform_8, window_bounds = array<i64: 1, 128>}, {transform_indices = @transform_9, window_bounds = array<i64: 1, 128, 128>}]} {
    %c0 = arith.constant 0 : index
    %0 = memref.load %arg1[%c0] : memref<3xf32, #tpu.memory_space<smem>>
    %c1 = arith.constant 1 : index
    %1 = memref.load %arg1[%c1] : memref<3xf32, #tpu.memory_space<smem>>
    %c2 = arith.constant 2 : index
    %2 = memref.load %arg1[%c2] : memref<3xf32, #tpu.memory_space<smem>>
    %c0_0 = arith.constant 0 : index
    %c0_1 = arith.constant 0 : index
    %c0_2 = arith.constant 0 : index
    %3 = vector.load %arg3[%c0_0, %c0_1, %c0_2] : memref<1x128x128xbf16, #tpu.memory_space<vmem>>, vector<1x128x128xbf16>
    %4 = tpu.iota {dimensions = array<i32: 0>} : vector<128x128xi32>
    %5 = tpu.iota {dimensions = array<i32: 1>} : vector<128x128xi32>
    %6 = arith.cmpi eq, %4, %5 : vector<128x128xi32>
    %7 = arith.extui %6 : vector<128x128xi1> to vector<128x128xi32>
    %8 = arith.sitofp %7 : vector<128x128xi32> to vector<128x128xf32>
    %9 = vector.broadcast %0 : f32 to vector<128x128xf32>
    %10 = arith.mulf %9, %8 : vector<128x128xf32>
    %11 = vector.shape_cast %10 : vector<128x128xf32> to vector<1x128x128xf32>
    %12 = arith.extf %3 : vector<1x128x128xbf16> to vector<1x128x128xf32>
    %13 = vector.broadcast %1 : f32 to vector<1x128x128xf32>
    %14 = arith.mulf %13, %12 : vector<1x128x128xf32>
    %15 = arith.addf %11, %14 : vector<1x128x128xf32>
    %16 = arith.truncf %12 : vector<1x128x128xf32> to vector<1x128x128xbf16>
    "tpu.trace_start"() <{level = 10 : i32, message = "gij,gjk->gik"}> : () -> ()
    %cst = arith.constant dense<0.000000e+00> : vector<1x128x128xf32>
    %17 = tpu.matmul %16, %3, %cst {dimension_numbers = #tpu.dot_dimension_numbers<[2], [1], [1], [2], [0, 0, 0, 1, 1, 2], [0], [0]>} : vector<1x128x128xbf16>, vector<1x128x128xbf16>, vector<1x128x128xf32> -> vector<1x128x128xf32>
    "tpu.trace_stop"() : () -> ()
    %18 = vector.broadcast %2 : f32 to vector<1x128x128xf32>
    %19 = arith.mulf %18, %17 : vector<1x128x128xf32>
    %20 = arith.addf %15, %19 : vector<1x128x128xf32>
    %21 = arith.truncf %20 : vector<1x128x128xf32> to vector<1x128x128xbf16>
    %c0_3 = arith.constant 0 : index
    %c0_4 = arith.constant 0 : index
    %c0_5 = arith.constant 0 : index
    %22 = vector.load %arg2[%c0_3, %c0_4, %c0_5] : memref<1x128x128xbf16, #tpu.memory_space<vmem>>, vector<1x128x128xbf16>
    %23 = vector.shape_cast %22 : vector<1x128x128xbf16> to vector<128x128xbf16>
    %c0_6 = arith.constant 0 : index
    %c0_7 = arith.constant 0 : index
    %24 = vector.load %arg4[%c0_6, %c0_7] : memref<128x128xbf16, #tpu.memory_space<vmem>>, vector<128x128xbf16>
    %cst_8 = arith.constant dense<0.000000e+00> : vector<128x128xf32>
    %25 = tpu.matmul %23, %24, %cst_8 {dimension_numbers = #tpu.dot_dimension_numbers<[1], [0], [0], [1], [0, 0, 1, 1], [], []>} : vector<128x128xbf16>, vector<128x128xbf16>, vector<128x128xf32> -> vector<128x128xf32>
    %c0_9 = arith.constant 0 : index
    %c0_10 = arith.constant 0 : index
    %26 = vector.load %arg5[%c0_9, %c0_10] : memref<1x128xf32, #tpu.memory_space<vmem>>, vector<1x128xf32>
    %27 = vector.broadcast %26 : vector<1x128xf32> to vector<128x128xf32>
    %28 = arith.addf %25, %27 : vector<128x128xf32>
    %29 = vector.shape_cast %28 : vector<128x128xf32> to vector<1x128x128xf32>
    %30 = arith.truncf %29 : vector<1x128x128xf32> to vector<1x128x128xbf16>
    "tpu.trace_start"() <{level = 10 : i32, message = "gij,gjh->gih"}> : () -> ()
    %cst_11 = arith.constant dense<0.000000e+00> : vector<1x128x128xf32>
    %31 = tpu.matmul %21, %30, %cst_11 {dimension_numbers = #tpu.dot_dimension_numbers<[2], [1], [1], [2], [0, 0, 0, 1, 1, 2], [0], [0]>} : vector<1x128x128xbf16>, vector<1x128x128xbf16>, vector<1x128x128xf32> -> vector<1x128x128xf32>
    "tpu.trace_stop"() : () -> ()
    %cst_12 = arith.constant 0.000000e+00 : f32
    %32 = vector.broadcast %cst_12 : f32 to vector<1x128x128xf32>
    %33 = arith.maximumf %31, %32 : vector<1x128x128xf32>
    %34 = vector.shape_cast %33 : vector<1x128x128xf32> to vector<128x128xf32>
    %35 = arith.truncf %34 : vector<128x128xf32> to vector<128x128xbf16>
    %c0_13 = arith.constant 0 : index
    %c0_14 = arith.constant 0 : index
    %36 = vector.load %arg6[%c0_13, %c0_14] : memref<128x128xbf16, #tpu.memory_space<vmem>>, vector<128x128xbf16>
    %cst_15 = arith.constant dense<0.000000e+00> : vector<128x128xf32>
    %37 = tpu.matmul %35, %36, %cst_15 {dimension_numbers = #tpu.dot_dimension_numbers<[1], [0], [0], [1], [0, 0, 1, 1], [], []>} : vector<128x128xbf16>, vector<128x128xbf16>, vector<128x128xf32> -> vector<128x128xf32>
    %c0_16 = arith.constant 0 : index
    %c0_17 = arith.constant 0 : index
    %38 = vector.load %arg7[%c0_16, %c0_17] : memref<1x128xf32, #tpu.memory_space<vmem>>, vector<1x128xf32>
    %39 = vector.broadcast %38 : vector<1x128xf32> to vector<128x128xf32>
    %40 = arith.addf %37, %39 : vector<128x128xf32>
    %41 = vector.shape_cast %40 : vector<128x128xf32> to vector<1x128x128xf32>
    %42 = arith.truncf %41 : vector<1x128x128xf32> to vector<1x128x128xbf16>
    "tpu.trace_start"() <{level = 10 : i32, message = "gij,gjh->gih"}> : () -> ()
    %cst_18 = arith.constant dense<0.000000e+00> : vector<1x128x128xf32>
    %43 = tpu.matmul %21, %42, %cst_18 {dimension_numbers = #tpu.dot_dimension_numbers<[2], [1], [1], [2], [0, 0, 0, 1, 1, 2], [0], [0]>} : vector<1x128x128xbf16>, vector<1x128x128xbf16>, vector<1x128x128xf32> -> vector<1x128x128xf32>
    "tpu.trace_stop"() : () -> ()
    %cst_19 = arith.constant 0.000000e+00 : f32
    %44 = vector.broadcast %cst_19 : f32 to vector<1x128x128xf32>
    %45 = arith.maximumf %43, %44 : vector<1x128x128xf32>
    %46 = vector.shape_cast %45 : vector<1x128x128xf32> to vector<128x128xf32>
    %47 = arith.truncf %46 : vector<128x128xf32> to vector<128x128xbf16>
    %c0_20 = arith.constant 0 : index
    %c0_21 = arith.constant 0 : index
    %48 = vector.load %arg8[%c0_20, %c0_21] : memref<128x128xbf16, #tpu.memory_space<vmem>>, vector<128x128xbf16>
    %cst_22 = arith.constant dense<0.000000e+00> : vector<128x128xf32>
    %49 = tpu.matmul %47, %48, %cst_22 {dimension_numbers = #tpu.dot_dimension_numbers<[1], [0], [0], [1], [0, 0, 1, 1], [], []>} : vector<128x128xbf16>, vector<128x128xbf16>, vector<128x128xf32> -> vector<128x128xf32>
    %c0_23 = arith.constant 0 : index
    %c0_24 = arith.constant 0 : index
    %50 = vector.load %arg9[%c0_23, %c0_24] : memref<1x128xf32, #tpu.memory_space<vmem>>, vector<1x128xf32>
    %51 = vector.broadcast %50 : vector<1x128xf32> to vector<128x128xf32>
    %52 = arith.addf %49, %51 : vector<128x128xf32>
    %53 = vector.shape_cast %52 : vector<128x128xf32> to vector<1x128x128xf32>
    %54 = tpu.iota {dimensions = array<i32: 2>} : vector<1x128x128xi32>
    %c4_i32 = arith.constant 4 : i32
    %55 = vector.broadcast %c4_i32 : i32 to vector<1x128x128xi32>
    %56 = arith.cmpi slt, %54, %55 : vector<1x128x128xi32>
    %cst_25 = arith.constant -1.000000e+30 : f32
    %57 = vector.broadcast %cst_25 : f32 to vector<1x128x128xf32>
    %58 = arith.select %56, %53, %57 : vector<1x128x128xi1>, vector<1x128x128xf32>
    %cst_26 = arith.constant dense<0xFF800000> : vector<1x128xf32>
    %59 = vector.multi_reduction <maximumf>, %58, %cst_26 [2] : vector<1x128x128xf32> to vector<1x128xf32>
    %60 = vector.shape_cast %59 : vector<1x128xf32> to vector<1x128x1xf32>
    %61 = vector.broadcast %60 : vector<1x128x1xf32> to vector<1x128x128xf32>
    %62 = arith.subf %58, %61 : vector<1x128x128xf32>
    %63 = math.exp %62 : vector<1x128x128xf32>
    %cst_27 = arith.constant dense<0.000000e+00> : vector<1x128xf32>
    %64 = vector.multi_reduction <add>, %63, %cst_27 [2] : vector<1x128x128xf32> to vector<1x128xf32>
    %65 = vector.shape_cast %64 : vector<1x128xf32> to vector<1x128x1xf32>
    %66 = math.log %65 : vector<1x128x1xf32>
    %67 = vector.broadcast %66 : vector<1x128x1xf32> to vector<1x128x128xf32>
    %68 = arith.subf %62, %67 : vector<1x128x128xf32>
    %c0_28 = arith.constant 0 : index
    %c0_29 = arith.constant 0 : index
    %c0_30 = arith.constant 0 : index
    %69 = vector.load %arg10[%c0_28, %c0_29, %c0_30] : memref<1x128x128xf32, #tpu.memory_space<vmem>>, vector<1x128x128xf32>
    tpu.vector_store %arg10[%c0_28, %c0_29, %c0_30], %68 {strides = array<i32>} : memref<1x128x128xf32, #tpu.memory_space<vmem>>, vector<1x128x128xf32>,
    return
  }
  func.func @transform_0(%arg0: i32) -> i32 {
    %c0_i32 = arith.constant 0 : i32
    %c0_i32_0 = arith.constant 0 : i32
    return %c0_i32 : i32
  }
  func.func @transform_1(%arg0: i32) -> (i32, i32, i32) {
    %c0_i32 = arith.constant 0 : i32
    %c0_i32_0 = arith.constant 0 : i32
    %c0_i32_1 = arith.constant 0 : i32
    return %arg0, %c0_i32, %c0_i32_0 : i32, i32, i32
  }
  func.func @transform_2(%arg0: i32) -> (i32, i32, i32) {
    %c0_i32 = arith.constant 0 : i32
    %c0_i32_0 = arith.constant 0 : i32
    %c0_i32_1 = arith.constant 0 : i32
    return %arg0, %c0_i32, %c0_i32_0 : i32, i32, i32
  }
  func.func @transform_3(%arg0: i32) -> (i32, i32) {
    %c0_i32 = arith.constant 0 : i32
    %c0_i32_0 = arith.constant 0 : i32
    %c0_i32_1 = arith.constant 0 : i32
    return %c0_i32, %c0_i32_0 : i32, i32
  }
  func.func @transform_4(%arg0: i32) -> (i32, i32) {
    %c0_i32 = arith.constant 0 : i32
    %c0_i32_0 = arith.constant 0 : i32
    %c0_i32_1 = arith.constant 0 : i32
    return %c0_i32, %c0_i32_0 : i32, i32
  }
  func.func @transform_5(%arg0: i32) -> (i32, i32) {
    %c0_i32 = arith.constant 0 : i32
    %c0_i32_0 = arith.constant 0 : i32
    %c0_i32_1 = arith.constant 0 : i32
    return %c0_i32, %c0_i32_0 : i32, i32
  }
  func.func @transform_6(%arg0: i32) -> (i32, i32) {
    %c0_i32 = arith.constant 0 : i32
    %c0_i32_0 = arith.constant 0 : i32
    %c0_i32_1 = arith.constant 0 : i32
    return %c0_i32, %c0_i32_0 : i32, i32
  }
  func.func @transform_7(%arg0: i32) -> (i32, i32) {
    %c0_i32 = arith.constant 0 : i32
    %c0_i32_0 = arith.constant 0 : i32
    %c0_i32_1 = arith.constant 0 : i32
    return %c0_i32, %c0_i32_0 : i32, i32
  }
  func.func @transform_8(%arg0: i32) -> (i32, i32) {
    %c0_i32 = arith.constant 0 : i32
    %c0_i32_0 = arith.constant 0 : i32
    %c0_i32_1 = arith.constant 0 : i32
    return %c0_i32, %c0_i32_0 : i32, i32
  }
  func.func @transform_9(%arg0: i32) -> (i32, i32, i32) {
    %c0_i32 = arith.constant 0 : i32
    %c0_i32_0 = arith.constant 0 : i32
    %c0_i32_1 = arith.constant 0 : i32
    return %arg0, %c0_i32, %c0_i32_0 : i32, i32, i32
  }
}

</mosaic_0001>

<llo_original>
// kernel: tpu_custom_call.1
$region0: #{tpu_custom_call.1}
  #allocation0 [shape = 'u32[]', space=smem, size = 0x4, offset = 0x4, fixed_abs, tag = 'smem constant byte address 0x4 - core index']
  #allocation1 [shape = 'u32[144,128]{1,0:T(1,128)}', space=vmem, size = 0x12000, scoped, tag = 'internal scratch']
  %s0 = inlined_call_operand.hbm [shape: f32[3], index: 0, kind: input, shape index: {}]
  %s1 = inlined_call_operand.hbm [shape: bf16[2,128,128], index: 1, kind: input, shape index: {}]
  %s2 = inlined_call_operand.hbm [shape: bf16[2,128,128], index: 2, kind: input, shape index: {}]
  %s3 = inlined_call_operand.hbm [shape: bf16[128,128], index: 3, kind: input, shape index: {}]
  %s4 = inlined_call_operand.vmem [shape: f32[1,128], index: 4, kind: input, shape index: {}]
  %s5 = inlined_call_operand.hbm [shape: bf16[128,128], index: 5, kind: input, shape index: {}]
  %s6 = inlined_call_operand.vmem [shape: f32[1,128], index: 6, kind: input, shape index: {}]
  %s7 = inlined_call_operand.hbm [shape: bf16[128,128], index: 7, kind: input, shape index: {}]
  %s8 = inlined_call_operand.vmem [shape: f32[1,128], index: 8, kind: input, shape index: {}]
  %s9 = inlined_call_operand.hbm [shape: f32[2,128,128], index: 9, kind: output, shape index: {}]
  %s10 = sld [smem:[#allocation0]]
  $region93: #{tpu_custom_call.1} parent=0
    _
  %s12 = ssub.s32 1, %s10
  %s13 = scalar_select 0, %s12, %s10
  $region1: #{tpu_custom_call.1} parent=0
    #allocation2 [shape = 'u8[512]{0}', space=smem, size = 0x200, scoped, tag = 'input window, operand 0, single buffered']
    #allocation3 [shape = 's32[2]{0}', space=sflag, size = 0x8, scoped, tag = 'scoped memory for tpu_custom_call.1']
    #allocation4 [shape = 's32[2]{0}', space=sflag, size = 0x8, scoped, tag = 'scoped memory for tpu_custom_call.1']
    #allocation5 [shape = 's32[2]{0}', space=sflag, size = 0x8, scoped, tag = 'scoped memory for tpu_custom_call.1']
    #allocation6 [shape = 'u8[65536]{0}', space=vmem, size = 0x10000, scoped, tag = 'input window, operand 1']
    #allocation7 [shape = 'u8[65536]{0}', space=vmem, size = 0x10000, scoped, tag = 'input window, operand 2']
    #allocation8 [shape = 's32[2]{0}', space=sflag, size = 0x8, scoped, tag = 'scoped memory for tpu_custom_call.1']
    #allocation9 [shape = 'u8[32768]{0}', space=vmem, size = 0x8000, scoped, tag = 'input window, operand 3, single buffered']
    #allocation10 [shape = 'u8[32768]{0}', space=vmem, size = 0x8000, scoped, tag = 'input window, operand 5, single buffered']
    #allocation11 [shape = 's32[1]{0}', space=sflag, size = 0x4, scoped, tag = 'scoped memory for tpu_custom_call.1']
    #allocation12 [shape = 'u8[32768]{0}', space=vmem, size = 0x8000, scoped, tag = 'input window, operand 7, single buffered']
    #allocation13 [shape = 'u8[131072]{0}', space=vmem, size = 0x20000, scoped, tag = 'output window, operand 0']
    %14 = vsyncpa [#allocation5], 0
    %15 = vsyncpa [#allocation3], 0
    %s16 = scalar_lea.sflag [#allocation3], 1
    %17 = vsyncpa %s16, 0
    %18 = vsyncpa [#allocation8], 0
    %s19 = scalar_lea.sflag [#allocation8], 1
    %20 = vsyncpa %s19, 0
    %21 = vsyncpa [#allocation11], 0
    %22 = vsyncpa [#allocation4], 0
    %s23 = scalar_lea.sflag [#allocation4], 1
    %24 = vsyncpa %s23, 0
    loop: start=0, step=1, limit=4
    $region2: #{tpu_custom_call.1} parent=1 // loop_pre_header
      _
    $region3: #{tpu_custom_call.1} parent=1 // loop_header
      %s26 = sphi 0, %s30
      %p27 = scmp.ge.s32.totalorder %s26, 4
      %s34 = sphi 0, %s34
      %s36 = sphi 0, %s34
      %s37 = sphi 0, %s36
      %s51 = sphi 0, %s37
      %s57 = sphi 0, %s59
      %s60 = sphi 0, %s57
      %s61 = sphi 0, %s60
      %s77 = sphi 0, %s61
      %s83 = sphi 0, %s85
      %s86 = sphi 0, %s83
      %s87 = sphi 0, %s86
      %s103 = sphi 0, %s87
      %s107 = sphi 0, %s107
      %s109 = sphi 0, %s107
      %s110 = sphi 0, %s109
      %s124 = sphi 0, %s110
      %s128 = sphi 0, %s128
      %s130 = sphi 0, %s128
      %s131 = sphi 0, %s130
      %s145 = sphi 0, %s131
      %s149 = sphi 0, %s149
      %s151 = sphi 0, %s149
      %s152 = sphi 0, %s151
      %s166 = sphi 0, %s152
      %s170 = sphi 0, %s170
      %s172 = sphi 0, %s170
      %s173 = sphi 0, %s172
      %s187 = sphi 0, %s173
      %s191 = sphi 0, %s191
      %s193 = sphi 0, %s191
      %s194 = sphi 0, %s193
      %s208 = sphi 0, %s194
      %s212 = sphi 0, %s212
      %s214 = sphi 0, %s212
      %s215 = sphi 0, %s214
      %s229 = sphi 0, %s215
      %s235 = sphi 0, %s237
      %s238 = sphi 0, %s235
      %s239 = sphi 0, %s238
      %s255 = sphi 0, %s239
    $region4: #{tpu_custom_call.1} parent=1 // loop_header_branch
      %29 = sbr.rel (%p27) target = $region8
    $region5: #{tpu_custom_call.1} parent=1 // loop_body
      %s31 = ssub.s32 %s26, 1
      %s32 = ssub.s32 %s26, 2
      %s33 = sadd.s32 %s26, 1
      %s35 = sadd.s32 %s34, 1
      %p38 = scmp.eq.s32.totalorder %s26, 1
      %p39 = scmp.ne.s32.totalorder %s34, %s36
      %p40 = scmp.eq.s32.totalorder %s26, 0
      %p41 = por %p39, %p40
      %p42 = scmp.ne.s32.totalorder %s34, %s36
      %p43 = scmp.eq.s32.totalorder %s31, 1
      %p44 = por %p42, %p43
      %p45 = scmp.ne.s32.totalorder %s36, %s37
      %p46 = scmp.eq.s32.totalorder %s31, 0
      %p47 = por %p45, %p46
      %p48 = scmp.ne.s32.totalorder %s36, %s37
      %p49 = scmp.eq.s32.totalorder %s32, 1
      %p50 = por %p48, %p49
      %p52 = scmp.ne.s32.totalorder %s37, %s51
      %p53 = scmp.eq.s32.totalorder %s32, 0
      %p54 = por %p52, %p53
      %s55 = ssub.s32 %s26, %s33
      %p56 = scmp.eq.s32.totalorder %s55, 0
      %s58 = sadd.s32 %s57, 1
      %s59 = scalar_select %p56, %s57, %s58
      %p62 = pneg %p56
      %p63 = scmp.eq.s32.totalorder %s26, 1
      %p64 = por %p62, %p63
      %p65 = scmp.ne.s32.totalorder %s57, %s60
      %p66 = scmp.eq.s32.totalorder %s26, 0
      %p67 = por %p65, %p66
      %p68 = scmp.ne.s32.totalorder %s57, %s60
      %p69 = scmp.eq.s32.totalorder %s31, 1
      %p70 = por %p68, %p69
      %p71 = scmp.ne.s32.totalorder %s60, %s61
      %p72 = scmp.eq.s32.totalorder %s31, 0
      %p73 = por %p71, %p72
      %p74 = scmp.ne.s32.totalorder %s60, %s61
      %p75 = scmp.eq.s32.totalorder %s32, 1
      %p76 = por %p74, %p75
      %p78 = scmp.ne.s32.totalorder %s61, %s77
      %p79 = scmp.eq.s32.totalorder %s32, 0
      %p80 = por %p78, %p79
      %s81 = ssub.s32 %s26, %s33
      %p82 = scmp.eq.s32.totalorder %s81, 0
      %s84 = sadd.s32 %s83, 1
      %s85 = scalar_select %p82, %s83, %s84
      %p88 = pneg %p82
      %p89 = scmp.eq.s32.totalorder %s26, 1
      %p90 = por %p88, %p89
      %p91 = scmp.ne.s32.totalorder %s83, %s86
      %p92 = scmp.eq.s32.totalorder %s26, 0
      %p93 = por %p91, %p92
      %p94 = scmp.ne.s32.totalorder %s83, %s86
      %p95 = scmp.eq.s32.totalorder %s31, 1
      %p96 = por %p94, %p95
      %p97 = scmp.ne.s32.totalorder %s86, %s87
      %p98 = scmp.eq.s32.totalorder %s31, 0
      %p99 = por %p97, %p98
      %p100 = scmp.ne.s32.totalorder %s86, %s87
      %p101 = scmp.eq.s32.totalorder %s32, 1
      %p102 = por %p100, %p101
      %p104 = scmp.ne.s32.totalorder %s87, %s103
      %p105 = scmp.eq.s32.totalorder %s32, 0
      %p106 = por %p104, %p105
      %s108 = sadd.s32 %s107, 1
      %p111 = scmp.eq.s32.totalorder %s26, 1
      %p112 = scmp.ne.s32.totalorder %s107, %s109
      %p113 = scmp.eq.s32.totalorder %s26, 0
      %p114 = por %p112, %p113
      %p115 = scmp.ne.s32.totalorder %s107, %s109
      %p116 = scmp.eq.s32.totalorder %s31, 1
      %p117 = por %p115, %p116
      %p118 = scmp.ne.s32.totalorder %s109, %s110
      %p119 = scmp.eq.s32.totalorder %s31, 0
      %p120 = por %p118, %p119
      %p121 = scmp.ne.s32.totalorder %s109, %s110
      %p122 = scmp.eq.s32.totalorder %s32, 1
      %p123 = por %p121, %p122
      %p125 = scmp.ne.s32.totalorder %s110, %s124
      %p126 = scmp.eq.s32.totalorder %s32, 0
      %p127 = por %p125, %p126
      %s129 = sadd.s32 %s128, 1
      %p132 = scmp.eq.s32.totalorder %s26, 1
      %p133 = scmp.ne.s32.totalorder %s128, %s130
      %p134 = scmp.eq.s32.totalorder %s26, 0
      %p135 = por %p133, %p134
      %p136 = scmp.ne.s32.totalorder %s128, %s130
      %p137 = scmp.eq.s32.totalorder %s31, 1
      %p138 = por %p136, %p137
      %p139 = scmp.ne.s32.totalorder %s130, %s131
      %p140 = scmp.eq.s32.totalorder %s31, 0
      %p141 = por %p139, %p140
      %p142 = scmp.ne.s32.totalorder %s130, %s131
      %p143 = scmp.eq.s32.totalorder %s32, 1
      %p144 = por %p142, %p143
      %p146 = scmp.ne.s32.totalorder %s131, %s145
      %p147 = scmp.eq.s32.totalorder %s32, 0
      %p148 = por %p146, %p147
      %s150 = sadd.s32 %s149, 1
      %p153 = scmp.eq.s32.totalorder %s26, 1
      %p154 = scmp.ne.s32.totalorder %s149, %s151
      %p155 = scmp.eq.s32.totalorder %s26, 0
      %p156 = por %p154, %p155
      %p157 = scmp.ne.s32.totalorder %s149, %s151
      %p158 = scmp.eq.s32.totalorder %s31, 1
      %p159 = por %p157, %p158
      %p160 = scmp.ne.s32.totalorder %s151, %s152
      %p161 = scmp.eq.s32.totalorder %s31, 0
      %p162 = por %p160, %p161
      %p163 = scmp.ne.s32.totalorder %s151, %s152
      %p164 = scmp.eq.s32.totalorder %s32, 1
      %p165 = por %p163, %p164
      %p167 = scmp.ne.s32.totalorder %s152, %s166
      %p168 = scmp.eq.s32.totalorder %s32, 0
      %p169 = por %p167, %p168
      %s171 = sadd.s32 %s170, 1
      %p174 = scmp.eq.s32.totalorder %s26, 1
      %p175 = scmp.ne.s32.totalorder %s170, %s172
      %p176 = scmp.eq.s32.totalorder %s26, 0
      %p177 = por %p175, %p176
      %p178 = scmp.ne.s32.totalorder %s170, %s172
      %p179 = scmp.eq.s32.totalorder %s31, 1
      %p180 = por %p178, %p179
      %p181 = scmp.ne.s32.totalorder %s172, %s173
      %p182 = scmp.eq.s32.totalorder %s31, 0
      %p183 = por %p181, %p182
      %p184 = scmp.ne.s32.totalorder %s172, %s173
      %p185 = scmp.eq.s32.totalorder %s32, 1
      %p186 = por %p184, %p185
      %p188 = scmp.ne.s32.totalorder %s173, %s187
      %p189 = scmp.eq.s32.totalorder %s32, 0
      %p190 = por %p188, %p189
      %s192 = sadd.s32 %s191, 1
      %p195 = scmp.eq.s32.totalorder %s26, 1
      %p196 = scmp.ne.s32.totalorder %s191, %s193
      %p197 = scmp.eq.s32.totalorder %s26, 0
      %p198 = por %p196, %p197
      %p199 = scmp.ne.s32.totalorder %s191, %s193
      %p200 = scmp.eq.s32.totalorder %s31, 1
      %p201 = por %p199, %p200
      %p202 = scmp.ne.s32.totalorder %s193, %s194
      %p203 = scmp.eq.s32.totalorder %s31, 0
      %p204 = por %p202, %p203
      %p205 = scmp.ne.s32.totalorder %s193, %s194
      %p206 = scmp.eq.s32.totalorder %s32, 1
      %p207 = por %p205, %p206
      %p209 = scmp.ne.s32.totalorder %s194, %s208
      %p210 = scmp.eq.s32.totalorder %s32, 0
      %p211 = por %p209, %p210
      %s213 = sadd.s32 %s212, 1
      %p216 = scmp.eq.s32.totalorder %s26, 1
      %p217 = scmp.ne.s32.totalorder %s212, %s214
      %p218 = scmp.eq.s32.totalorder %s26, 0
      %p219 = por %p217, %p218
      %p220 = scmp.ne.s32.totalorder %s212, %s214
      %p221 = scmp.eq.s32.totalorder %s31, 1
      %p222 = por %p220, %p221
      %p223 = scmp.ne.s32.totalorder %s214, %s215
      %p224 = scmp.eq.s32.totalorder %s31, 0
      %p225 = por %p223, %p224
      %p226 = scmp.ne.s32.totalorder %s214, %s215
      %p227 = scmp.eq.s32.totalorder %s32, 1
      %p228 = por %p226, %p227
      %p230 = scmp.ne.s32.totalorder %s215, %s229
      %p231 = scmp.eq.s32.totalorder %s32, 0
      %p232 = por %p230, %p231
      %s233 = ssub.s32 %s26, %s33
      %p234 = scmp.eq.s32.totalorder %s233, 0
      %s236 = sadd.s32 %s235, 1
      %s237 = scalar_select %p234, %s235, %s236
      %p240 = pneg %p234
      %p241 = scmp.eq.s32.totalorder %s26, 1
      %p242 = por %p240, %p241
      %p243 = scmp.ne.s32.totalorder %s235, %s238
      %p244 = scmp.eq.s32.totalorder %s26, 0
      %p245 = por %p243, %p244
      %p246 = scmp.ne.s32.totalorder %s235, %s238
      %p247 = scmp.eq.s32.totalorder %s31, 1
      %p248 = por %p246, %p247
      %p249 = scmp.ne.s32.totalorder %s238, %s239
      %p250 = scmp.eq.s32.totalorder %s31, 0
      %p251 = por %p249, %p250
      %p252 = scmp.ne.s32.totalorder %s238, %s239
      %p253 = scmp.eq.s32.totalorder %s32, 1
      %p254 = por %p252, %p253
      %p256 = scmp.ne.s32.totalorder %s239, %s255
      %p257 = scmp.eq.s32.totalorder %s32, 0
      %p258 = por %p256, %p257
      %p259 = scmp.le.s32.totalorder 1, %s26
      %p260 = scmp.lt.s32.totalorder %s26, 3
      %p261 = pnand %p259, %p260
      %p262 = pneg %p261
      // Predicated region
      $region9: #{tpu_custom_call.1} parent=5 // pred_check
        _
      $region10: #{tpu_custom_call.1} parent=5 // pred_check_branch
        %264 = sbr.rel (%p261) target = $region12
      $region11: #{tpu_custom_call.1} parent=5 // pred_region
        %s265 = ssub.s32 %s26, 1
        // Predicated region
        $region13: #{tpu_custom_call.1} parent=11 // pred_check
          %p266 = pneg %p47
        $region14: #{tpu_custom_call.1} parent=11 // pred_check_branch
          %268 = sbr.rel (%p266) target = $region16
        $region15: #{tpu_custom_call.1} parent=11 // pred_region
          %s270 = ssub.s32 16, 16
          %271 = vsyncadd [#allocation5], %s270
          %274 = dma.hbm_to_smem %s0, 16, [#allocation2], [#allocation5]
        $region16: #{tpu_custom_call.1} parent=11 // pred_fallthru
          _
        // Predicated region
        $region17: #{tpu_custom_call.1} parent=11 // pred_check
          %p275 = pneg %p120
        $region18: #{tpu_custom_call.1} parent=11 // pred_check_branch
          %277 = sbr.rel (%p275) target = $region20
        $region19: #{tpu_custom_call.1} parent=11 // pred_region
          %s279 = ssub.s32 1024, 1024
          %280 = vsyncadd [#allocation8], %s279
          %s281 = sshll.u32 [#allocation9], 4
          %s282 = int_to_ptr.vmem [resolvable:$true] %s281
          %287 = dma.hbm_to_vmem [thread:$0]  %s3, 1024, %s282, [#allocation8], 64, 64, 4
        $region20: #{tpu_custom_call.1} parent=11 // pred_fallthru
          _
        // Predicated region
        $region21: #{tpu_custom_call.1} parent=11 // pred_check
          %p288 = pneg %p141
        $region22: #{tpu_custom_call.1} parent=11 // pred_check_branch
          %290 = sbr.rel (%p288) target = $region24
        $region23: #{tpu_custom_call.1} parent=11 // pred_region
          _
        $region24: #{tpu_custom_call.1} parent=11 // pred_fallthru
          _
        // Predicated region
        $region25: #{tpu_custom_call.1} parent=11 // pred_check
          %p291 = pneg %p162
        $region26: #{tpu_custom_call.1} parent=11 // pred_check_branch
          %293 = sbr.rel (%p291) target = $region28
        $region27: #{tpu_custom_call.1} parent=11 // pred_region
          %s295 = ssub.s32 1024, 1024
          %296 = vsyncadd [#allocation11], %s295
          %s297 = sshll.u32 [#allocation10], 4
          %s298 = int_to_ptr.vmem [resolvable:$true] %s297
          %303 = dma.hbm_to_vmem [thread:$0]  %s5, 1024, %s298, [#allocation11], 64, 64, 4
        $region28: #{tpu_custom_call.1} parent=11 // pred_fallthru
          _
        // Predicated region
        $region29: #{tpu_custom_call.1} parent=11 // pred_check
          %p304 = pneg %p183
        $region30: #{tpu_custom_call.1} parent=11 // pred_check_branch
          %306 = sbr.rel (%p304) target = $region32
        $region31: #{tpu_custom_call.1} parent=11 // pred_region
          _
        $region32: #{tpu_custom_call.1} parent=11 // pred_fallthru
          _
        // Predicated region
        $region33: #{tpu_custom_call.1} parent=11 // pred_check
          %p307 = pneg %p204
        $region34: #{tpu_custom_call.1} parent=11 // pred_check_branch
          %309 = sbr.rel (%p307) target = $region36
        $region35: #{tpu_custom_call.1} parent=11 // pred_region
          %s311 = ssub.s32 1024, 1024
          %312 = vsyncadd [#allocation11], %s311
          %s313 = sshll.u32 [#allocation12], 4
          %s314 = int_to_ptr.vmem [resolvable:$true] %s313
          %319 = dma.hbm_to_vmem [thread:$0]  %s7, 1024, %s314, [#allocation11], 64, 64, 4
        $region36: #{tpu_custom_call.1} parent=11 // pred_fallthru
          _
        // Predicated region
        $region37: #{tpu_custom_call.1} parent=11 // pred_check
          %p320 = pneg %p225
        $region38: #{tpu_custom_call.1} parent=11 // pred_check_branch
          %322 = sbr.rel (%p320) target = $region40
        $region39: #{tpu_custom_call.1} parent=11 // pred_region
          _
        $region40: #{tpu_custom_call.1} parent=11 // pred_fallthru
          _
      $region12: #{tpu_custom_call.1} parent=5 // pred_fallthru
        _
      %p323 = scmp.lt.s32.totalorder %s26, 2
      // Predicated region
      $region41: #{tpu_custom_call.1} parent=5 // pred_check
        %p324 = pneg %p323
      $region42: #{tpu_custom_call.1} parent=5 // pred_check_branch
        %326 = sbr.rel (%p324) target = $region44
      $region43: #{tpu_custom_call.1} parent=5 // pred_region
        // Predicated region
        $region45: #{tpu_custom_call.1} parent=43 // pred_check
          %p327 = pneg %p67
        $region46: #{tpu_custom_call.1} parent=43 // pred_check_branch
          %329 = sbr.rel (%p327) target = $region48
        $region47: #{tpu_custom_call.1} parent=43 // pred_region
          %s330 = sand.u32 %s57, 1
          %s331 = scalar_lea.sflag [#allocation3], %s330
          %s332 = sand.u32 %s57, 1
          %s333 = smul.addr %s332, 64
          %s334 = scalar_lea.vmem [#allocation6], %s333
          %s336 = ssub.s32 1024, 1024
          %337 = vsyncadd %s331, %s336
          %s338 = smul.addr %s26, 16
          %s339 = smul.addr %s338, 64
          %s340 = scalar_lea.hbm %s1, %s339
          %s341 = sshll.u32 %s334, 4
          %s342 = int_to_ptr.vmem [resolvable:$true] %s341
          %347 = dma.hbm_to_vmem [thread:$0]  %s340, 1024, %s342, %s331, 64, 64, 4
        $region48: #{tpu_custom_call.1} parent=43 // pred_fallthru
          _
        // Predicated region
        $region49: #{tpu_custom_call.1} parent=43 // pred_check
          %p348 = pneg %p93
        $region50: #{tpu_custom_call.1} parent=43 // pred_check_branch
          %350 = sbr.rel (%p348) target = $region52
        $region51: #{tpu_custom_call.1} parent=43 // pred_region
          %s351 = sand.u32 %s26, 1
          %s352 = scalar_lea.sflag [#allocation8], %s351
          %s353 = sand.u32 %s83, 1
          %s354 = smul.addr %s353, 64
          %s355 = scalar_lea.vmem [#allocation7], %s354
          %s357 = ssub.s32 1024, 1024
          %358 = vsyncadd %s352, %s357
          %s359 = smul.addr %s26, 16
          %s360 = smul.addr %s359, 64
          %s361 = scalar_lea.hbm %s2, %s360
          %s362 = sshll.u32 %s355, 4
          %s363 = int_to_ptr.vmem [resolvable:$true] %s362
          %368 = dma.hbm_to_vmem [thread:$0]  %s361, 1024, %s363, %s352, 64, 64, 4
        $region52: #{tpu_custom_call.1} parent=43 // pred_fallthru
          _
      $region44: #{tpu_custom_call.1} parent=5 // pred_fallthru
        _
      %p369 = scmp.le.s32.totalorder 1, %s26
      %p370 = scmp.lt.s32.totalorder %s26, 3
      %p371 = pnand %p369, %p370
      %p372 = pneg %p371
      // Predicated region
      $region53: #{tpu_custom_call.1} parent=5 // pred_check
        _
      $region54: #{tpu_custom_call.1} parent=5 // pred_check_branch
        %374 = sbr.rel (%p371) target = $region56
      $region55: #{tpu_custom_call.1} parent=5 // pred_region
        %s375 = ssub.s32 %s26, 1
        // Predicated region
        $region57: #{tpu_custom_call.1} parent=55 // pred_check
          %p376 = pneg %p47
        $region58: #{tpu_custom_call.1} parent=55 // pred_check_branch
          %378 = sbr.rel (%p376) target = $region60
        $region59: #{tpu_custom_call.1} parent=55 // pred_region
          %379 = dma.done [#allocation5], 16
        $region60: #{tpu_custom_call.1} parent=55 // pred_fallthru
          _
        %s380 = sand.u32 %s60, 1
        %s381 = scalar_lea.sflag [#allocation3], %s380
        %s382 = sand.u32 %s60, 1
        %s383 = smul.addr %s382, 64
        %s384 = scalar_lea.vmem [#allocation6], %s383
        // Predicated region
        $region61: #{tpu_custom_call.1} parent=55 // pred_check
          %p385 = pneg %p73
        $region62: #{tpu_custom_call.1} parent=55 // pred_check_branch
          %387 = sbr.rel (%p385) target = $region64
        $region63: #{tpu_custom_call.1} parent=55 // pred_region
          %388 = dma.done %s381, 1024
        $region64: #{tpu_custom_call.1} parent=55 // pred_fallthru
          _
        %s389 = sand.u32 %s31, 1
        %s390 = scalar_lea.sflag [#allocation8], %s389
        %s391 = sand.u32 %s86, 1
        %s392 = smul.addr %s391, 64
        %s393 = scalar_lea.vmem [#allocation7], %s392
        // Predicated region
        $region65: #{tpu_custom_call.1} parent=55 // pred_check
          %p394 = pneg %p99
        $region66: #{tpu_custom_call.1} parent=55 // pred_check_branch
          %396 = sbr.rel (%p394) target = $region68
        $region67: #{tpu_custom_call.1} parent=55 // pred_region
          %397 = dma.done %s390, 1024
        $region68: #{tpu_custom_call.1} parent=55 // pred_fallthru
          _
        // Predicated region
        $region69: #{tpu_custom_call.1} parent=55 // pred_check
          %p398 = pneg %p120
        $region70: #{tpu_custom_call.1} parent=55 // pred_check_branch
          %400 = sbr.rel (%p398) target = $region72
        $region71: #{tpu_custom_call.1} parent=55 // pred_region
          %401 = dma.done [#allocation8], 1024
        $region72: #{tpu_custom_call.1} parent=55 // pred_fallthru
          _
        // Predicated region
        $region73: #{tpu_custom_call.1} parent=55 // pred_check
          %p402 = pneg %p162
        $region74: #{tpu_custom_call.1} parent=55 // pred_check_branch
          %404 = sbr.rel (%p402) target = $region76
        $region75: #{tpu_custom_call.1} parent=55 // pred_region
          %405 = dma.done [#allocation11], 1024
        $region76: #{tpu_custom_call.1} parent=55 // pred_fallthru
          _
        // Predicated region
        $region77: #{tpu_custom_call.1} parent=55 // pred_check
          %p406 = pneg %p204
        $region78: #{tpu_custom_call.1} parent=55 // pred_check_branch
          %408 = sbr.rel (%p406) target = $region80
        $region79: #{tpu_custom_call.1} parent=55 // pred_region
          %409 = dma.done [#allocation11], 1024
        $region80: #{tpu_custom_call.1} parent=55 // pred_fallthru
          _
        %410 = sfence
        %p411 = pneg %p47
        %p412 = pneg %p44
        %s413 = sand.u32 %s60, 1
        %s414 = scalar_lea.sflag [#allocation3], %s413
        %s415 = sand.u32 %s60, 1
        %s416 = smul.addr %s415, 64
        %s417 = scalar_lea.vmem [#allocation6], %s416
        %p418 = pneg %p73
        %p419 = pneg %p70
        %s420 = sand.u32 %s31, 1
        %s421 = scalar_lea.sflag [#allocation8], %s420
        %s422 = sand.u32 %s86, 1
        %s423 = smul.addr %s422, 64
        %s424 = scalar_lea.vmem [#allocation7], %s423
        %p425 = pneg %p99
        %p426 = pneg %p96
        %p427 = pneg %p120
        %p428 = pneg %p117
        %p429 = pneg %p141
        %p430 = pneg %p138
        %p431 = pneg %p162
        %p432 = pneg %p159
        %p433 = pneg %p183
        %p434 = pneg %p180
        %p435 = pneg %p204
        %p436 = pneg %p201
        %p437 = pneg %p225
        %p438 = pneg %p222
        %p439 = pneg %p251
        %p440 = pneg %p248
        %s441 = sand.u32 %s238, 1
        %s442 = scalar_lea.sflag [#allocation4], %s441
        %s443 = sand.u32 %s238, 1
        %s444 = smul.addr %s443, 128
        %s445 = scalar_lea.vmem [#allocation13], %s444
        %s447 = sld [smem:[#allocation2]]
        %s448 = sld [smem:[#allocation2 + $0x1]]
        %s449 = sld [smem:[#allocation2 + $0x2]]
        %v450 = vld [vmem:[%s393] sm:$0xf]
        %v451 = vld [vmem:[%s393 + $0x4] sm:$0xf]
        %v452 = vld [vmem:[%s393 + $0x8] sm:$0xf]
        %v453 = vld [vmem:[%s393 + $0xc] sm:$0xf]
        %v454 = vld [vmem:[%s393 + $0x10] sm:$0xf]
        %v455 = vld [vmem:[%s393 + $0x14] sm:$0xf]
        %v456 = vld [vmem:[%s393 + $0x18] sm:$0xf]
        %v457 = vld [vmem:[%s393 + $0x1c] sm:$0xf]
        %v458 = vld [vmem:[%s393 + $0x20] sm:$0xf]
        %v459 = vld [vmem:[%s393 + $0x24] sm:$0xf]
        %v460 = vld [vmem:[%s393 + $0x28] sm:$0xf]
        %v461 = vld [vmem:[%s393 + $0x2c] sm:$0xf]
        %v462 = vld [vmem:[%s393 + $0x30] sm:$0xf]
        %v463 = vld [vmem:[%s393 + $0x34] sm:$0xf]
        %v464 = vld [vmem:[%s393 + $0x38] sm:$0xf]
        %v465 = vld [vmem:[%s393 + $0x3c] sm:$0xf]
        %v466 = vlaneseq
        %v467 = vshrl.u32 %v466, 7
        %v468 = vadd.s32 %v467, 8
        %v469 = vadd.s32 %v467, 16
        %v470 = vadd.s32 %v467, 24
        %v471 = vadd.s32 %v467, 32
        %v472 = vadd.s32 %v467, 40
        %v473 = vadd.s32 %v467, 48
        %v474 = vadd.s32 %v467, 56
        %v475 = vadd.s32 %v467, 64
        %v476 = vadd.s32 %v467, 72
        %v477 = vadd.s32 %v467, 80
        %v478 = vadd.s32 %v467, 88
        %v479 = vadd.s32 %v467, 96
        %v480 = vadd.s32 %v467, 104
        %v481 = vadd.s32 %v467, 112
        %v482 = vadd.s32 %v467, 120
        %v483 = vlaneseq
        %v484 = vand.u32 %v483, 127
        %vm485 = vcmp.eq.s32.totalorder %v467, %v484
        %vm486 = vcmp.eq.s32.totalorder %v468, %v484
        %vm487 = vcmp.eq.s32.totalorder %v469, %v484
        %vm488 = vcmp.eq.s32.totalorder %v470, %v484
        %vm489 = vcmp.eq.s32.totalorder %v471, %v484
        %vm490 = vcmp.eq.s32.totalorder %v472, %v484
        %vm491 = vcmp.eq.s32.totalorder %v473, %v484
        %vm492 = vcmp.eq.s32.totalorder %v474, %v484
        %vm493 = vcmp.eq.s32.totalorder %v475, %v484
        %vm494 = vcmp.eq.s32.totalorder %v476, %v484
        %vm495 = vcmp.eq.s32.totalorder %v477, %v484
        %vm496 = vcmp.eq.s32.totalorder %v478, %v484
        %vm497 = vcmp.eq.s32.totalorder %v479, %v484
        %vm498 = vcmp.eq.s32.totalorder %v480, %v484
        %vm499 = vcmp.eq.s32.totalorder %v481, %v484
        %vm500 = vcmp.eq.s32.totalorder %v482, %v484
        %v501 = vsel %vm485, 1, 0
        %v502 = vsel %vm486, 1, 0
        %v503 = vsel %vm487, 1, 0
        %v504 = vsel %vm488, 1, 0
        %v505 = vsel %vm489, 1, 0
        %v506 = vsel %vm490, 1, 0
        %v507 = vsel %vm491, 1, 0
        %v508 = vsel %vm492, 1, 0
        %v509 = vsel %vm493, 1, 0
        %v510 = vsel %vm494, 1, 0
        %v511 = vsel %vm495, 1, 0
        %v512 = vsel %vm496, 1, 0
        %v513 = vsel %vm497, 1, 0
        %v514 = vsel %vm498, 1, 0
        %v515 = vsel %vm499, 1, 0
        %v516 = vsel %vm500, 1, 0
        %v517 = vcvt.s32.f32 %v501
        %v518 = vcvt.s32.f32 %v502
        %v519 = vcvt.s32.f32 %v503
        %v520 = vcvt.s32.f32 %v504
        %v521 = vcvt.s32.f32 %v505
        %v522 = vcvt.s32.f32 %v506
        %v523 = vcvt.s32.f32 %v507
        %v524 = vcvt.s32.f32 %v508
        %v525 = vcvt.s32.f32 %v509
        %v526 = vcvt.s32.f32 %v510
        %v527 = vcvt.s32.f32 %v511
        %v528 = vcvt.s32.f32 %v512
        %v529 = vcvt.s32.f32 %v513
        %v530 = vcvt.s32.f32 %v514
        %v531 = vcvt.s32.f32 %v515
        %v532 = vcvt.s32.f32 %v516
        %v533 = vstv %s447
        %v534 = vmul.f32 %v533, %v517
        %v535 = vmul.f32 %v533, %v518
        %v536 = vmul.f32 %v533, %v519
        %v537 = vmul.f32 %v533, %v520
        %v538 = vmul.f32 %v533, %v521
        %v539 = vmul.f32 %v533, %v522
        %v540 = vmul.f32 %v533, %v523
        %v541 = vmul.f32 %v533, %v524
        %v542 = vmul.f32 %v533, %v525
        %v543 = vmul.f32 %v533, %v526
        %v544 = vmul.f32 %v533, %v527
        %v545 = vmul.f32 %v533, %v528
        %v546 = vmul.f32 %v533, %v529
        %v547 = vmul.f32 %v533, %v530
        %v548 = vmul.f32 %v533, %v531
        %v549 = vmul.f32 %v533, %v532
        %v550 = vunpack.c.l.bf16 %v450
        %v551 = vunpack.c.l.bf16 %v451
        %v552 = vunpack.c.l.bf16 %v452
        %v553 = vunpack.c.l.bf16 %v453
        %v554 = vunpack.c.l.bf16 %v454
        %v555 = vunpack.c.l.bf16 %v455
        %v556 = vunpack.c.l.bf16 %v456
        %v557 = vunpack.c.l.bf16 %v457
        %v558 = vunpack.c.l.bf16 %v458
        %v559 = vunpack.c.l.bf16 %v459
        %v560 = vunpack.c.l.bf16 %v460
        %v561 = vunpack.c.l.bf16 %v461
        %v562 = vunpack.c.l.bf16 %v462
        %v563 = vunpack.c.l.bf16 %v463
        %v564 = vunpack.c.l.bf16 %v464
        %v565 = vunpack.c.l.bf16 %v465
        %v566 = vstv %s448
        %v567 = vmul.f32 %v566, %v550
        %v568 = vmul.f32 %v566, %v551
        %v569 = vmul.f32 %v566, %v552
        %v570 = vmul.f32 %v566, %v553
        %v571 = vmul.f32 %v566, %v554
        %v572 = vmul.f32 %v566, %v555
        %v573 = vmul.f32 %v566, %v556
        %v574 = vmul.f32 %v566, %v557
        %v575 = vmul.f32 %v566, %v558
        %v576 = vmul.f32 %v566, %v559
        %v577 = vmul.f32 %v566, %v560
        %v578 = vmul.f32 %v566, %v561
        %v579 = vmul.f32 %v566, %v562
        %v580 = vmul.f32 %v566, %v563
        %v581 = vmul.f32 %v566, %v564
        %v582 = vmul.f32 %v566, %v565
        %v583 = vadd.f32 %v534, %v567
        %v584 = vadd.f32 %v535, %v568
        %v585 = vadd.f32 %v536, %v569
        %v586 = vadd.f32 %v537, %v570
        %v587 = vadd.f32 %v538, %v571
        %v588 = vadd.f32 %v539, %v572
        %v589 = vadd.f32 %v540, %v573
        %v590 = vadd.f32 %v541, %v574
        %v591 = vadd.f32 %v542, %v575
        %v592 = vadd.f32 %v543, %v576
        %v593 = vadd.f32 %v544, %v577
        %v594 = vadd.f32 %v545, %v578
        %v595 = vadd.f32 %v546, %v579
        %v596 = vadd.f32 %v547, %v580
        %v597 = vadd.f32 %v548, %v581
        %v598 = vadd.f32 %v549, %v582
        %v615 = vunpack.c.l.b16 %v450
        %v616 = vunpack.c.l.b16 %v451
        %v617 = vunpack.c.l.b16 %v452
        %v618 = vunpack.c.l.b16 %v453
        %v619 = vunpack.c.l.b16 %v454
        %v620 = vunpack.c.l.b16 %v455
        %v621 = vunpack.c.l.b16 %v456
        %v622 = vunpack.c.l.b16 %v457
        %v623 = vunpack.c.l.b16 %v458
        %v624 = vunpack.c.l.b16 %v459
        %v625 = vunpack.c.l.b16 %v460
        %v626 = vunpack.c.l.b16 %v461
        %v627 = vunpack.c.l.b16 %v462
        %v628 = vunpack.c.l.b16 %v463
        %v629 = vunpack.c.l.b16 %v464
        %v630 = vunpack.c.l.b16 %v465
        %v631 = vpack.c.b16 %v616, %v615
        %v632 = vpack.c.b16 %v618, %v617
        %v633 = vpack.c.b16 %v620, %v619
        %v634 = vpack.c.b16 %v622, %v621
        %v635 = vpack.c.b16 %v624, %v623
        %v636 = vpack.c.b16 %v626, %v625
        %v637 = vpack.c.b16 %v628, %v627
        %v638 = vpack.c.b16 %v630, %v629
        %647 = vmatprep.subr.bf16.mxu0 0
        %648 = vmatpush1.bf16.msra.mxu0 %v631
        %649 = vmatprep.subr.bf16.mxu0 0
        %650 = vmatpush1.bf16.msra.mxu0 %v632
        %651 = vmatprep.subr.bf16.mxu0 0
        %652 = vmatpush1.bf16.msra.mxu0 %v633
        %653 = vmatprep.subr.bf16.mxu0 0
        %654 = vmatpush1.bf16.msra.mxu0 %v634
        %655 = vmatprep.subr.bf16.mxu0 0
        %656 = vmatpush1.bf16.msra.mxu0 %v635
        %657 = vmatprep.subr.bf16.mxu0 0
        %658 = vmatpush1.bf16.msra.mxu0 %v636
        %659 = vmatprep.subr.bf16.mxu0 0
        %660 = vmatpush1.bf16.msra.mxu0 %v637
        %661 = vmatprep.subr.bf16.mxu0 0
        %662 = vmatpush1.bf16.msra.mxu0 %v638
        %663 = vmatprep.subr.bf16.mxu0 0
        %664 = vmatpush1.bf16.msra.mxu0 0
        %665 = vmatprep.subr.bf16.mxu0 0
        %666 = vmatpush1.bf16.msra.mxu0 0
        %667 = vmatprep.subr.bf16.mxu0 0
        %668 = vmatpush1.bf16.msra.mxu0 0
        %669 = vmatprep.subr.bf16.mxu0 0
        %670 = vmatpush1.bf16.msra.mxu0 0
        %671 = vmatprep.subr.bf16.mxu0 0
        %672 = vmatpush1.bf16.msra.mxu0 0
        %673 = vmatprep.subr.bf16.mxu0 0
        %674 = vmatpush1.bf16.msra.mxu0 0
        %675 = vmatprep.subr.bf16.mxu0 0
        %676 = vmatpush1.bf16.msra.mxu0 0
        %677 = vmatprep.subr.bf16.mxu0 0
        %678 = vmatpush1.bf16.msra.mxu0 0
        %679 = vmatprep.mubr.bf16.mxu0 0
        %680 = vmatmul.mubr.bf16.gmra.mrb[0].mxu0 %v631
        %v681 = vpop.f32.mrb[0].mxu0
        %v682 = vadd.f32 0.0, %v681
        %v683 = vpop.f32.mrb[0].mxu0
        %v684 = vpop.f32.mrb[0].mxu0
        %v685 = vadd.f32 0.0, %v684
        %v686 = vpop.f32.mrb[0].mxu0
        %687 = vmatprep.mubr.bf16.mxu0 0
        %688 = vmatmul.mubr.bf16.gmra.mrb[0].mxu0 %v632
        %v689 = vpop.f32.mrb[0].mxu0
        %v690 = vadd.f32 0.0, %v689
        %v691 = vpop.f32.mrb[0].mxu0
        %v692 = vpop.f32.mrb[0].mxu0
        %v693 = vadd.f32 0.0, %v692
        %v694 = vpop.f32.mrb[0].mxu0
        %695 = vmatprep.mubr.bf16.mxu0 0
        %696 = vmatmul.mubr.bf16.gmra.mrb[0].mxu0 %v633
        %v697 = vpop.f32.mrb[0].mxu0
        %v698 = vadd.f32 0.0, %v697
        %v699 = vpop.f32.mrb[0].mxu0
        %v700 = vpop.f32.mrb[0].mxu0
        %v701 = vadd.f32 0.0, %v700
        %v702 = vpop.f32.mrb[0].mxu0
        %703 = vmatprep.mubr.bf16.mxu0 0
        %704 = vmatmul.mubr.bf16.gmra.mrb[0].mxu0 %v634
        %v705 = vpop.f32.mrb[0].mxu0
        %v706 = vadd.f32 0.0, %v705
        %v707 = vpop.f32.mrb[0].mxu0
        %v708 = vpop.f32.mrb[0].mxu0
        %v709 = vadd.f32 0.0, %v708
        %v710 = vpop.f32.mrb[0].mxu0
        %711 = vmatprep.mubr.bf16.mxu0 0
        %712 = vmatmul.mubr.bf16.gmra.mrb[0].mxu0 %v635
        %v713 = vpop.f32.mrb[0].mxu0
        %v714 = vadd.f32 0.0, %v713
        %v715 = vpop.f32.mrb[0].mxu0
        %v716 = vpop.f32.mrb[0].mxu0
        %v717 = vadd.f32 0.0, %v716
        %v718 = vpop.f32.mrb[0].mxu0
        %719 = vmatprep.mubr.bf16.mxu0 0
        %720 = vmatmul.mubr.bf16.gmra.mrb[0].mxu0 %v636
        %v721 = vpop.f32.mrb[0].mxu0
        %v722 = vadd.f32 0.0, %v721
        %v723 = vpop.f32.mrb[0].mxu0
        %v724 = vpop.f32.mrb[0].mxu0
        %v725 = vadd.f32 0.0, %v724
        %v726 = vpop.f32.mrb[0].mxu0
        %727 = vmatprep.mubr.bf16.mxu0 0
        %728 = vmatmul.mubr.bf16.gmra.mrb[0].mxu0 %v637
        %v729 = vpop.f32.mrb[0].mxu0
        %v730 = vadd.f32 0.0, %v729
        %v731 = vpop.f32.mrb[0].mxu0
        %v732 = vpop.f32.mrb[0].mxu0
        %v733 = vadd.f32 0.0, %v732
        %v734 = vpop.f32.mrb[0].mxu0
        %735 = vmatprep.mubr.bf16.mxu0 0
        %736 = vmatmul.mubr.bf16.gmra.mrb[0].mxu0 %v638
        %v737 = vpop.f32.mrb[0].mxu0
        %v738 = vadd.f32 0.0, %v737
        %v739 = vpop.f32.mrb[0].mxu0
        %v740 = vpop.f32.mrb[0].mxu0
        %v741 = vadd.f32 0.0, %v740
        %v742 = vpop.f32.mrb[0].mxu0
        %743 = vdwg.mxu0
        %v744 = vstv %s449
        %v745 = vmul.f32 %v744, %v682
        %v746 = vmul.f32 %v744, %v685
        %v747 = vmul.f32 %v744, %v690
        %v748 = vmul.f32 %v744, %v693
        %v749 = vmul.f32 %v744, %v698
        %v750 = vmul.f32 %v744, %v701
        %v751 = vmul.f32 %v744, %v706
        %v752 = vmul.f32 %v744, %v709
        %v753 = vmul.f32 %v744, %v714
        %v754 = vmul.f32 %v744, %v717
        %v755 = vmul.f32 %v744, %v722
        %v756 = vmul.f32 %v744, %v725
        %v757 = vmul.f32 %v744, %v730
        %v758 = vmul.f32 %v744, %v733
        %v759 = vmul.f32 %v744, %v738
        %v760 = vmul.f32 %v744, %v741
        %v761 = vadd.f32 %v583, %v745
        %v762 = vadd.f32 %v584, %v746
        %v763 = vadd.f32 %v585, %v747
        %v764 = vadd.f32 %v586, %v748
        %v765 = vadd.f32 %v587, %v749
        %v766 = vadd.f32 %v588, %v750
        %v767 = vadd.f32 %v589, %v751
        %v768 = vadd.f32 %v590, %v752
        %v769 = vadd.f32 %v591, %v753
        %v770 = vadd.f32 %v592, %v754
        %v771 = vadd.f32 %v593, %v755
        %v772 = vadd.f32 %v594, %v756
        %v773 = vadd.f32 %v595, %v757
        %v774 = vadd.f32 %v596, %v758
        %v775 = vadd.f32 %v597, %v759
        %v776 = vadd.f32 %v598, %v760
        %v777 = vpack.c.bf16 %v762, %v761
        %v778 = vpack.c.bf16 %v764, %v763
        %v779 = vpack.c.bf16 %v766, %v765
        %v780 = vpack.c.bf16 %v768, %v767
        %v781 = vpack.c.bf16 %v770, %v769
        %v782 = vpack.c.bf16 %v772, %v771
        %v783 = vpack.c.bf16 %v774, %v773
        %v784 = vpack.c.bf16 %v776, %v775
        %v785 = vld [vmem:[%s384] sm:$0xf]
        %v786 = vld [vmem:[%s384 + $0x4] sm:$0xf]
        %v787 = vld [vmem:[%s384 + $0x8] sm:$0xf]
        %v788 = vld [vmem:[%s384 + $0xc] sm:$0xf]
        %v789 = vld [vmem:[%s384 + $0x10] sm:$0xf]
        %v790 = vld [vmem:[%s384 + $0x14] sm:$0xf]
        %v791 = vld [vmem:[%s384 + $0x18] sm:$0xf]
        %v792 = vld [vmem:[%s384 + $0x1c] sm:$0xf]
        %v793 = vld [vmem:[%s384 + $0x20] sm:$0xf]
        %v794 = vld [vmem:[%s384 + $0x24] sm:$0xf]
        %v795 = vld [vmem:[%s384 + $0x28] sm:$0xf]
        %v796 = vld [vmem:[%s384 + $0x2c] sm:$0xf]
        %v797 = vld [vmem:[%s384 + $0x30] sm:$0xf]
        %v798 = vld [vmem:[%s384 + $0x34] sm:$0xf]
        %v799 = vld [vmem:[%s384 + $0x38] sm:$0xf]
        %v800 = vld [vmem:[%s384 + $0x3c] sm:$0xf]
        %v801 = vld [vmem:[#allocation9] sm:$0xf]
        %v802 = vld [vmem:[#allocation9 + $0x4] sm:$0xf]
        %v803 = vld [vmem:[#allocation9 + $0x8] sm:$0xf]
        %v804 = vld [vmem:[#allocation9 + $0xc] sm:$0xf]
        %v805 = vld [vmem:[#allocation9 + $0x10] sm:$0xf]
        %v806 = vld [vmem:[#allocation9 + $0x14] sm:$0xf]
        %v807 = vld [vmem:[#allocation9 + $0x18] sm:$0xf]
        %v808 = vld [vmem:[#allocation9 + $0x1c] sm:$0xf]
        %v809 = vld [vmem:[#allocation9 + $0x20] sm:$0xf]
        %v810 = vld [vmem:[#allocation9 + $0x24] sm:$0xf]
        %v811 = vld [vmem:[#allocation9 + $0x28] sm:$0xf]
        %v812 = vld [vmem:[#allocation9 + $0x2c] sm:$0xf]
        %v813 = vld [vmem:[#allocation9 + $0x30] sm:$0xf]
        %v814 = vld [vmem:[#allocation9 + $0x34] sm:$0xf]
        %v815 = vld [vmem:[#allocation9 + $0x38] sm:$0xf]
        %v816 = vld [vmem:[#allocation9 + $0x3c] sm:$0xf]
        %v817 = vld [vmem:[%s4] sm:$0x1]
        %v819 = vlaneseq
        %v820 = vshrl.u32 %v819, 7
        %v821 = vsub.s32 0, %v820
        %v822 = vrot.slane %v817, %v821
        %v840 = vunpack.c.l.b16 %v785
        %v841 = vunpack.c.l.b16 %v786
        %v842 = vunpack.c.l.b16 %v787
        %v843 = vunpack.c.l.b16 %v788
        %v844 = vunpack.c.l.b16 %v789
        %v845 = vunpack.c.l.b16 %v790
        %v846 = vunpack.c.l.b16 %v791
        %v847 = vunpack.c.l.b16 %v792
        %v848 = vunpack.c.l.b16 %v793
        %v849 = vunpack.c.l.b16 %v794
        %v850 = vunpack.c.l.b16 %v795
        %v851 = vunpack.c.l.b16 %v796
        %v852 = vunpack.c.l.b16 %v797
        %v853 = vunpack.c.l.b16 %v798
        %v854 = vunpack.c.l.b16 %v799
        %v855 = vunpack.c.l.b16 %v800
        %v856 = vpack.c.b16 %v841, %v840
        %v857 = vpack.c.b16 %v843, %v842
        %v858 = vpack.c.b16 %v845, %v844
        %v859 = vpack.c.b16 %v847, %v846
        %v860 = vpack.c.b16 %v849, %v848
        %v861 = vpack.c.b16 %v851, %v850
        %v862 = vpack.c.b16 %v853, %v852
        %v863 = vpack.c.b16 %v855, %v854
        %v888 = vunpack.c.l.b16 %v801
        %v889 = vunpack.c.l.b16 %v802
        %v890 = vunpack.c.l.b16 %v803
        %v891 = vunpack.c.l.b16 %v804
        %v892 = vunpack.c.l.b16 %v805
        %v893 = vunpack.c.l.b16 %v806
        %v894 = vunpack.c.l.b16 %v807
        %v895 = vunpack.c.l.b16 %v808
        %v896 = vunpack.c.l.b16 %v809
        %v897 = vunpack.c.l.b16 %v810
        %v898 = vunpack.c.l.b16 %v811
        %v899 = vunpack.c.l.b16 %v812
        %v900 = vunpack.c.l.b16 %v813
        %v901 = vunpack.c.l.b16 %v814
        %v902 = vunpack.c.l.b16 %v815
        %v903 = vunpack.c.l.b16 %v816
        %v904 = vpack.c.b16 %v889, %v888
        %v905 = vpack.c.b16 %v891, %v890
        %v906 = vpack.c.b16 %v893, %v892
        %v907 = vpack.c.b16 %v895, %v894
        %v908 = vpack.c.b16 %v897, %v896
        %v909 = vpack.c.b16 %v899, %v898
        %v910 = vpack.c.b16 %v901, %v900
        %v911 = vpack.c.b16 %v903, %v902
        %920 = vmatprep.subr.bf16.mxu0 0
        %921 = vmatpush1.bf16.msra.mxu0 %v904
        %922 = vmatprep.subr.bf16.mxu0 0
        %923 = vmatpush1.bf16.msra.mxu0 %v905
        %924 = vmatprep.subr.bf16.mxu0 0
        %925 = vmatpush1.bf16.msra.mxu0 %v906
        %926 = vmatprep.subr.bf16.mxu0 0
        %927 = vmatpush1.bf16.msra.mxu0 %v907
        %928 = vmatprep.subr.bf16.mxu0 0
        %929 = vmatpush1.bf16.msra.mxu0 %v908
        %930 = vmatprep.subr.bf16.mxu0 0
        %931 = vmatpush1.bf16.msra.mxu0 %v909
        %932 = vmatprep.subr.bf16.mxu0 0
        %933 = vmatpush1.bf16.msra.mxu0 %v910
        %934 = vmatprep.subr.bf16.mxu0 0
        %935 = vmatpush1.bf16.msra.mxu0 %v911
        %936 = vmatprep.subr.bf16.mxu0 0
        %937 = vmatpush1.bf16.msra.mxu0 0
        %938 = vmatprep.subr.bf16.mxu0 0
        %939 = vmatpush1.bf16.msra.mxu0 0
        %940 = vmatprep.subr.bf16.mxu0 0
        %941 = vmatpush1.bf16.msra.mxu0 0
        %942 = vmatprep.subr.bf16.mxu0 0
        %943 = vmatpush1.bf16.msra.mxu0 0
        %944 = vmatprep.subr.bf16.mxu0 0
        %945 = vmatpush1.bf16.msra.mxu0 0
        %946 = vmatprep.subr.bf16.mxu0 0
        %947 = vmatpush1.bf16.msra.mxu0 0
        %948 = vmatprep.subr.bf16.mxu0 0
        %949 = vmatpush1.bf16.msra.mxu0 0
        %950 = vmatprep.subr.bf16.mxu0 0
        %951 = vmatpush1.bf16.msra.mxu0 0
        %952 = vmatprep.mubr.bf16.mxu0 0
        %953 = vmatmul.mubr.bf16.gmra.mrb[0].mxu0 %v856
        %v954 = vpop.f32.mrb[0].mxu0
        %v955 = vadd.f32 %v822, %v954
        %v956 = vpop.f32.mrb[0].mxu0
        %v957 = vpop.f32.mrb[0].mxu0
        %v958 = vadd.f32 %v822, %v957
        %v959 = vpop.f32.mrb[0].mxu0
        %960 = vmatprep.mubr.bf16.mxu0 0
        %961 = vmatmul.mubr.bf16.gmra.mrb[0].mxu0 %v857
        %v962 = vpop.f32.mrb[0].mxu0
        %v963 = vadd.f32 %v822, %v962
        %v964 = vpop.f32.mrb[0].mxu0
        %v965 = vpop.f32.mrb[0].mxu0
        %v966 = vadd.f32 %v822, %v965
        %v967 = vpop.f32.mrb[0].mxu0
        %968 = vmatprep.mubr.bf16.mxu0 0
        %969 = vmatmul.mubr.bf16.gmra.mrb[0].mxu0 %v858
        %v970 = vpop.f32.mrb[0].mxu0
        %v971 = vadd.f32 %v822, %v970
        %v972 = vpop.f32.mrb[0].mxu0
        %v973 = vpop.f32.mrb[0].mxu0
        %v974 = vadd.f32 %v822, %v973
        %v975 = vpop.f32.mrb[0].mxu0
        %976 = vmatprep.mubr.bf16.mxu0 0
        %977 = vmatmul.mubr.bf16.gmra.mrb[0].mxu0 %v859
        %v978 = vpop.f32.mrb[0].mxu0
        %v979 = vadd.f32 %v822, %v978
        %v980 = vpop.f32.mrb[0].mxu0
        %v981 = vpop.f32.mrb[0].mxu0
        %v982 = vadd.f32 %v822, %v981
        %v983 = vpop.f32.mrb[0].mxu0
        %984 = vmatprep.mubr.bf16.mxu0 0
        %985 = vmatmul.mubr.bf16.gmra.mrb[0].mxu0 %v860
        %v986 = vpop.f32.mrb[0].mxu0
        %v987 = vadd.f32 %v822, %v986
        %v988 = vpop.f32.mrb[0].mxu0
        %v989 = vpop.f32.mrb[0].mxu0
        %v990 = vadd.f32 %v822, %v989
        %v991 = vpop.f32.mrb[0].mxu0
        %992 = vmatprep.mubr.bf16.mxu0 0
        %993 = vmatmul.mubr.bf16.gmra.mrb[0].mxu0 %v861
        %v994 = vpop.f32.mrb[0].mxu0
        %v995 = vadd.f32 %v822, %v994
        %v996 = vpop.f32.mrb[0].mxu0
        %v997 = vpop.f32.mrb[0].mxu0
        %v998 = vadd.f32 %v822, %v997
        %v999 = vpop.f32.mrb[0].mxu0
        %1000 = vmatprep.mubr.bf16.mxu0 0
        %1001 = vmatmul.mubr.bf16.gmra.mrb[0].mxu0 %v862
        %v1002 = vpop.f32.mrb[0].mxu0
        %v1003 = vadd.f32 %v822, %v1002
        %v1004 = vpop.f32.mrb[0].mxu0
        %v1005 = vpop.f32.mrb[0].mxu0
        %v1006 = vadd.f32 %v822, %v1005
        %v1007 = vpop.f32.mrb[0].mxu0
        %1008 = vmatprep.mubr.bf16.mxu0 0
        %1009 = vmatmul.mubr.bf16.gmra.mrb[0].mxu0 %v863
        %v1010 = vpop.f32.mrb[0].mxu0
        %v1011 = vadd.f32 %v822, %v1010
        %v1012 = vpop.f32.mrb[0].mxu0
        %v1013 = vpop.f32.mrb[0].mxu0
        %v1014 = vadd.f32 %v822, %v1013
        %v1015 = vpop.f32.mrb[0].mxu0
        %1016 = vdwg.mxu0
        %v1017 = vpack.c.bf16 %v958, %v955
        %v1018 = vpack.c.bf16 %v966, %v963
        %v1019 = vpack.c.bf16 %v974, %v971
        %v1020 = vpack.c.bf16 %v982, %v979
        %v1021 = vpack.c.bf16 %v990, %v987
        %v1022 = vpack.c.bf16 %v998, %v995
        %v1023 = vpack.c.bf16 %v1006, %v1003
        %v1024 = vpack.c.bf16 %v1014, %v1011
        %1025 = vmatprep.subr.bf16.mxu0 0
        %1026 = vmatpush1.bf16.msra.mxu0 %v1017
        %1027 = vmatprep.subr.bf16.mxu0 0
        %1028 = vmatpush1.bf16.msra.mxu0 %v1018
        %1029 = vmatprep.subr.bf16.mxu0 0
        %1030 = vmatpush1.bf16.msra.mxu0 %v1019
        %1031 = vmatprep.subr.bf16.mxu0 0
        %1032 = vmatpush1.bf16.msra.mxu0 %v1020
        %1033 = vmatprep.subr.bf16.mxu0 0
        %1034 = vmatpush1.bf16.msra.mxu0 %v1021
        %1035 = vmatprep.subr.bf16.mxu0 0
        %1036 = vmatpush1.bf16.msra.mxu0 %v1022
        %1037 = vmatprep.subr.bf16.mxu0 0
        %1038 = vmatpush1.bf16.msra.mxu0 %v1023
        %1039 = vmatprep.subr.bf16.mxu0 0
        %1040 = vmatpush1.bf16.msra.mxu0 %v1024
        %1041 = vmatprep.subr.bf16.mxu0 0
        %1042 = vmatpush1.bf16.msra.mxu0 0
        %1043 = vmatprep.subr.bf16.mxu0 0
        %1044 = vmatpush1.bf16.msra.mxu0 0
        %1045 = vmatprep.subr.bf16.mxu0 0
        %1046 = vmatpush1.bf16.msra.mxu0 0
        %1047 = vmatprep.subr.bf16.mxu0 0
        %1048 = vmatpush1.bf16.msra.mxu0 0
        %1049 = vmatprep.subr.bf16.mxu0 0
        %1050 = vmatpush1.bf16.msra.mxu0 0
        %1051 = vmatprep.subr.bf16.mxu0 0
        %1052 = vmatpush1.bf16.msra.mxu0 0
        %1053 = vmatprep.subr.bf16.mxu0 0
        %1054 = vmatpush1.bf16.msra.mxu0 0
        %1055 = vmatprep.subr.bf16.mxu0 0
        %1056 = vmatpush1.bf16.msra.mxu0 0
        %1057 = vmatprep.mubr.bf16.mxu0 0
        %1058 = vmatmul.mubr.bf16.gmra.mrb[0].mxu0 %v777
        %v1059 = vpop.f32.mrb[0].mxu0
        %v1060 = vadd.f32 0.0, %v1059
        %v1061 = vpop.f32.mrb[0].mxu0
        %v1062 = vpop.f32.mrb[0].mxu0
        %v1063 = vadd.f32 0.0, %v1062
        %v1064 = vpop.f32.mrb[0].mxu0
        %1065 = vmatprep.mubr.bf16.mxu0 0
        %1066 = vmatmul.mubr.bf16.gmra.mrb[0].mxu0 %v778
        %v1067 = vpop.f32.mrb[0].mxu0
        %v1068 = vadd.f32 0.0, %v1067
        %v1069 = vpop.f32.mrb[0].mxu0
        %v1070 = vpop.f32.mrb[0].mxu0
        %v1071 = vadd.f32 0.0, %v1070
        %v1072 = vpop.f32.mrb[0].mxu0
        %1073 = vmatprep.mubr.bf16.mxu0 0
        %1074 = vmatmul.mubr.bf16.gmra.mrb[0].mxu0 %v779
        %v1075 = vpop.f32.mrb[0].mxu0
        %v1076 = vadd.f32 0.0, %v1075
        %v1077 = vpop.f32.mrb[0].mxu0
        %v1078 = vpop.f32.mrb[0].mxu0
        %v1079 = vadd.f32 0.0, %v1078
        %v1080 = vpop.f32.mrb[0].mxu0
        %1081 = vmatprep.mubr.bf16.mxu0 0
        %1082 = vmatmul.mubr.bf16.gmra.mrb[0].mxu0 %v780
        %v1083 = vpop.f32.mrb[0].mxu0
        %v1084 = vadd.f32 0.0, %v1083
        %v1085 = vpop.f32.mrb[0].mxu0
        %v1086 = vpop.f32.mrb[0].mxu0
        %v1087 = vadd.f32 0.0, %v1086
        %v1088 = vpop.f32.mrb[0].mxu0
        %1089 = vmatprep.mubr.bf16.mxu0 0
        %1090 = vmatmul.mubr.bf16.gmra.mrb[0].mxu0 %v781
        %v1091 = vpop.f32.mrb[0].mxu0
        %v1092 = vadd.f32 0.0, %v1091
        %v1093 = vpop.f32.mrb[0].mxu0
        %v1094 = vpop.f32.mrb[0].mxu0
        %v1095 = vadd.f32 0.0, %v1094
        %v1096 = vpop.f32.mrb[0].mxu0
        %1097 = vmatprep.mubr.bf16.mxu0 0
        %1098 = vmatmul.mubr.bf16.gmra.mrb[0].mxu0 %v782
        %v1099 = vpop.f32.mrb[0].mxu0
        %v1100 = vadd.f32 0.0, %v1099
        %v1101 = vpop.f32.mrb[0].mxu0
        %v1102 = vpop.f32.mrb[0].mxu0
        %v1103 = vadd.f32 0.0, %v1102
        %v1104 = vpop.f32.mrb[0].mxu0
        %1105 = vmatprep.mubr.bf16.mxu0 0
        %1106 = vmatmul.mubr.bf16.gmra.mrb[0].mxu0 %v783
        %v1107 = vpop.f32.mrb[0].mxu0
        %v1108 = vadd.f32 0.0, %v1107
        %v1109 = vpop.f32.mrb[0].mxu0
        %v1110 = vpop.f32.mrb[0].mxu0
        %v1111 = vadd.f32 0.0, %v1110
        %v1112 = vpop.f32.mrb[0].mxu0
        %1113 = vmatprep.mubr.bf16.mxu0 0
        %1114 = vmatmul.mubr.bf16.gmra.mrb[0].mxu0 %v784
        %v1115 = vpop.f32.mrb[0].mxu0
        %v1116 = vadd.f32 0.0, %v1115
        %v1117 = vpop.f32.mrb[0].mxu0
        %v1118 = vpop.f32.mrb[0].mxu0
        %v1119 = vadd.f32 0.0, %v1118
        %v1120 = vpop.f32.mrb[0].mxu0
        %1121 = vdwg.mxu0
        %v1122 = vmax.f32 %v1060, 0.0
        %v1123 = vmax.f32 %v1063, 0.0
        %v1124 = vmax.f32 %v1068, 0.0
        %v1125 = vmax.f32 %v1071, 0.0
        %v1126 = vmax.f32 %v1076, 0.0
        %v1127 = vmax.f32 %v1079, 0.0
        %v1128 = vmax.f32 %v1084, 0.0
        %v1129 = vmax.f32 %v1087, 0.0
        %v1130 = vmax.f32 %v1092, 0.0
        %v1131 = vmax.f32 %v1095, 0.0
        %v1132 = vmax.f32 %v1100, 0.0
        %v1133 = vmax.f32 %v1103, 0.0
        %v1134 = vmax.f32 %v1108, 0.0
        %v1135 = vmax.f32 %v1111, 0.0
        %v1136 = vmax.f32 %v1116, 0.0
        %v1137 = vmax.f32 %v1119, 0.0
        %v1138 = vpack.c.bf16 %v1123, %v1122
        %v1139 = vpack.c.bf16 %v1125, %v1124
        %v1140 = vpack.c.bf16 %v1127, %v1126
        %v1141 = vpack.c.bf16 %v1129, %v1128
        %v1142 = vpack.c.bf16 %v1131, %v1130
        %v1143 = vpack.c.bf16 %v1133, %v1132
        %v1144 = vpack.c.bf16 %v1135, %v1134
        %v1145 = vpack.c.bf16 %v1137, %v1136
        %v1146 = vld [vmem:[#allocation10] sm:$0xf]
        %v1147 = vld [vmem:[#allocation10 + $0x4] sm:$0xf]
        %v1148 = vld [vmem:[#allocation10 + $0x8] sm:$0xf]
        %v1149 = vld [vmem:[#allocation10 + $0xc] sm:$0xf]
        %v1150 = vld [vmem:[#allocation10 + $0x10] sm:$0xf]
        %v1151 = vld [vmem:[#allocation10 + $0x14] sm:$0xf]
        %v1152 = vld [vmem:[#allocation10 + $0x18] sm:$0xf]
        %v1153 = vld [vmem:[#allocation10 + $0x1c] sm:$0xf]
        %v1154 = vld [vmem:[#allocation10 + $0x20] sm:$0xf]
        %v1155 = vld [vmem:[#allocation10 + $0x24] sm:$0xf]
        %v1156 = vld [vmem:[#allocation10 + $0x28] sm:$0xf]
        %v1157 = vld [vmem:[#allocation10 + $0x2c] sm:$0xf]
        %v1158 = vld [vmem:[#allocation10 + $0x30] sm:$0xf]
        %v1159 = vld [vmem:[#allocation10 + $0x34] sm:$0xf]
        %v1160 = vld [vmem:[#allocation10 + $0x38] sm:$0xf]
        %v1161 = vld [vmem:[#allocation10 + $0x3c] sm:$0xf]
        %v1162 = vld [vmem:[%s6] sm:$0x1]
        %v1164 = vlaneseq
        %v1165 = vshrl.u32 %v1164, 7
        %v1166 = vsub.s32 0, %v1165
        %v1167 = vrot.slane %v1162, %v1166
        %v1185 = vunpack.c.l.b16 %v1146
        %v1186 = vunpack.c.l.b16 %v1147
        %v1187 = vunpack.c.l.b16 %v1148
        %v1188 = vunpack.c.l.b16 %v1149
        %v1189 = vunpack.c.l.b16 %v1150
        %v1190 = vunpack.c.l.b16 %v1151
        %v1191 = vunpack.c.l.b16 %v1152
        %v1192 = vunpack.c.l.b16 %v1153
        %v1193 = vunpack.c.l.b16 %v1154
        %v1194 = vunpack.c.l.b16 %v1155
        %v1195 = vunpack.c.l.b16 %v1156
        %v1196 = vunpack.c.l.b16 %v1157
        %v1197 = vunpack.c.l.b16 %v1158
        %v1198 = vunpack.c.l.b16 %v1159
        %v1199 = vunpack.c.l.b16 %v1160
        %v1200 = vunpack.c.l.b16 %v1161
        %v1201 = vpack.c.b16 %v1186, %v1185
        %v1202 = vpack.c.b16 %v1188, %v1187
        %v1203 = vpack.c.b16 %v1190, %v1189
        %v1204 = vpack.c.b16 %v1192, %v1191
        %v1205 = vpack.c.b16 %v1194, %v1193
        %v1206 = vpack.c.b16 %v1196, %v1195
        %v1207 = vpack.c.b16 %v1198, %v1197
        %v1208 = vpack.c.b16 %v1200, %v1199
        %1217 = vmatprep.subr.bf16.mxu0 0
        %1218 = vmatpush1.bf16.msra.mxu0 %v1201
        %1219 = vmatprep.subr.bf16.mxu0 0
        %1220 = vmatpush1.bf16.msra.mxu0 %v1202
        %1221 = vmatprep.subr.bf16.mxu0 0
        %1222 = vmatpush1.bf16.msra.mxu0 %v1203
        %1223 = vmatprep.subr.bf16.mxu0 0
        %1224 = vmatpush1.bf16.msra.mxu0 %v1204
        %1225 = vmatprep.subr.bf16.mxu0 0
        %1226 = vmatpush1.bf16.msra.mxu0 %v1205
        %1227 = vmatprep.subr.bf16.mxu0 0
        %1228 = vmatpush1.bf16.msra.mxu0 %v1206
        %1229 = vmatprep.subr.bf16.mxu0 0
        %1230 = vmatpush1.bf16.msra.mxu0 %v1207
        %1231 = vmatprep.subr.bf16.mxu0 0
        %1232 = vmatpush1.bf16.msra.mxu0 %v1208
        %1233 = vmatprep.subr.bf16.mxu0 0
        %1234 = vmatpush1.bf16.msra.mxu0 0
        %1235 = vmatprep.subr.bf16.mxu0 0
        %1236 = vmatpush1.bf16.msra.mxu0 0
        %1237 = vmatprep.subr.bf16.mxu0 0
        %1238 = vmatpush1.bf16.msra.mxu0 0
        %1239 = vmatprep.subr.bf16.mxu0 0
        %1240 = vmatpush1.bf16.msra.mxu0 0
        %1241 = vmatprep.subr.bf16.mxu0 0
        %1242 = vmatpush1.bf16.msra.mxu0 0
        %1243 = vmatprep.subr.bf16.mxu0 0
        %1244 = vmatpush1.bf16.msra.mxu0 0
        %1245 = vmatprep.subr.bf16.mxu0 0
        %1246 = vmatpush1.bf16.msra.mxu0 0
        %1247 = vmatprep.subr.bf16.mxu0 0
        %1248 = vmatpush1.bf16.msra.mxu0 0
        %1249 = vmatprep.mubr.bf16.mxu0 0
        %1250 = vmatmul.mubr.bf16.gmra.mrb[0].mxu0 %v1138
        %v1251 = vpop.f32.mrb[0].mxu0
        %v1252 = vadd.f32 %v1167, %v1251
        %v1253 = vpop.f32.mrb[0].mxu0
        %v1254 = vpop.f32.mrb[0].mxu0
        %v1255 = vadd.f32 %v1167, %v1254
        %v1256 = vpop.f32.mrb[0].mxu0
        %1257 = vmatprep.mubr.bf16.mxu0 0
        %1258 = vmatmul.mubr.bf16.gmra.mrb[0].mxu0 %v1139
        %v1259 = vpop.f32.mrb[0].mxu0
        %v1260 = vadd.f32 %v1167, %v1259
        %v1261 = vpop.f32.mrb[0].mxu0
        %v1262 = vpop.f32.mrb[0].mxu0
        %v1263 = vadd.f32 %v1167, %v1262
        %v1264 = vpop.f32.mrb[0].mxu0
        %1265 = vmatprep.mubr.bf16.mxu0 0
        %1266 = vmatmul.mubr.bf16.gmra.mrb[0].mxu0 %v1140
        %v1267 = vpop.f32.mrb[0].mxu0
        %v1268 = vadd.f32 %v1167, %v1267
        %v1269 = vpop.f32.mrb[0].mxu0
        %v1270 = vpop.f32.mrb[0].mxu0
        %v1271 = vadd.f32 %v1167, %v1270
        %v1272 = vpop.f32.mrb[0].mxu0
        %1273 = vmatprep.mubr.bf16.mxu0 0
        %1274 = vmatmul.mubr.bf16.gmra.mrb[0].mxu0 %v1141
        %v1275 = vpop.f32.mrb[0].mxu0
        %v1276 = vadd.f32 %v1167, %v1275
        %v1277 = vpop.f32.mrb[0].mxu0
        %v1278 = vpop.f32.mrb[0].mxu0
        %v1279 = vadd.f32 %v1167, %v1278
        %v1280 = vpop.f32.mrb[0].mxu0
        %1281 = vmatprep.mubr.bf16.mxu0 0
        %1282 = vmatmul.mubr.bf16.gmra.mrb[0].mxu0 %v1142
        %v1283 = vpop.f32.mrb[0].mxu0
        %v1284 = vadd.f32 %v1167, %v1283
        %v1285 = vpop.f32.mrb[0].mxu0
        %v1286 = vpop.f32.mrb[0].mxu0
        %v1287 = vadd.f32 %v1167, %v1286
        %v1288 = vpop.f32.mrb[0].mxu0
        %1289 = vmatprep.mubr.bf16.mxu0 0
        %1290 = vmatmul.mubr.bf16.gmra.mrb[0].mxu0 %v1143
        %v1291 = vpop.f32.mrb[0].mxu0
        %v1292 = vadd.f32 %v1167, %v1291
        %v1293 = vpop.f32.mrb[0].mxu0
        %v1294 = vpop.f32.mrb[0].mxu0
        %v1295 = vadd.f32 %v1167, %v1294
        %v1296 = vpop.f32.mrb[0].mxu0
        %1297 = vmatprep.mubr.bf16.mxu0 0
        %1298 = vmatmul.mubr.bf16.gmra.mrb[0].mxu0 %v1144
        %v1299 = vpop.f32.mrb[0].mxu0
        %v1300 = vadd.f32 %v1167, %v1299
        %v1301 = vpop.f32.mrb[0].mxu0
        %v1302 = vpop.f32.mrb[0].mxu0
        %v1303 = vadd.f32 %v1167, %v1302
        %v1304 = vpop.f32.mrb[0].mxu0
        %1305 = vmatprep.mubr.bf16.mxu0 0
        %1306 = vmatmul.mubr.bf16.gmra.mrb[0].mxu0 %v1145
        %v1307 = vpop.f32.mrb[0].mxu0
        %v1308 = vadd.f32 %v1167, %v1307
        %v1309 = vpop.f32.mrb[0].mxu0
        %v1310 = vpop.f32.mrb[0].mxu0
        %v1311 = vadd.f32 %v1167, %v1310
        %v1312 = vpop.f32.mrb[0].mxu0
        %1313 = vdwg.mxu0
        %v1314 = vpack.c.bf16 %v1255, %v1252
        %v1315 = vpack.c.bf16 %v1263, %v1260
        %v1316 = vpack.c.bf16 %v1271, %v1268
        %v1317 = vpack.c.bf16 %v1279, %v1276
        %v1318 = vpack.c.bf16 %v1287, %v1284
        %v1319 = vpack.c.bf16 %v1295, %v1292
        %v1320 = vpack.c.bf16 %v1303, %v1300
        %v1321 = vpack.c.bf16 %v1311, %v1308
        %1322 = vmatprep.subr.bf16.mxu0 0
        %1323 = vmatpush1.bf16.msra.mxu0 %v1314
        %1324 = vmatprep.subr.bf16.mxu0 0
        %1325 = vmatpush1.bf16.msra.mxu0 %v1315
        %1326 = vmatprep.subr.bf16.mxu0 0
        %1327 = vmatpush1.bf16.msra.mxu0 %v1316
        %1328 = vmatprep.subr.bf16.mxu0 0
        %1329 = vmatpush1.bf16.msra.mxu0 %v1317
        %1330 = vmatprep.subr.bf16.mxu0 0
        %1331 = vmatpush1.bf16.msra.mxu0 %v1318
        %1332 = vmatprep.subr.bf16.mxu0 0
        %1333 = vmatpush1.bf16.msra.mxu0 %v1319
        %1334 = vmatprep.subr.bf16.mxu0 0
        %1335 = vmatpush1.bf16.msra.mxu0 %v1320
        %1336 = vmatprep.subr.bf16.mxu0 0
        %1337 = vmatpush1.bf16.msra.mxu0 %v1321
        %1338 = vmatprep.subr.bf16.mxu0 0
        %1339 = vmatpush1.bf16.msra.mxu0 0
        %1340 = vmatprep.subr.bf16.mxu0 0
        %1341 = vmatpush1.bf16.msra.mxu0 0
        %1342 = vmatprep.subr.bf16.mxu0 0
        %1343 = vmatpush1.bf16.msra.mxu0 0
        %1344 = vmatprep.subr.bf16.mxu0 0
        %1345 = vmatpush1.bf16.msra.mxu0 0
        %1346 = vmatprep.subr.bf16.mxu0 0
        %1347 = vmatpush1.bf16.msra.mxu0 0
        %1348 = vmatprep.subr.bf16.mxu0 0
        %1349 = vmatpush1.bf16.msra.mxu0 0
        %1350 = vmatprep.subr.bf16.mxu0 0
        %1351 = vmatpush1.bf16.msra.mxu0 0
        %1352 = vmatprep.subr.bf16.mxu0 0
        %1353 = vmatpush1.bf16.msra.mxu0 0
        %1354 = vmatprep.mubr.bf16.mxu0 0
        %1355 = vmatmul.mubr.bf16.gmra.mrb[0].mxu0 %v777
        %v1356 = vpop.f32.mrb[0].mxu0
        %v1357 = vadd.f32 0.0, %v1356
        %v1358 = vpop.f32.mrb[0].mxu0
        %v1359 = vpop.f32.mrb[0].mxu0
        %v1360 = vadd.f32 0.0, %v1359
        %v1361 = vpop.f32.mrb[0].mxu0
        %1362 = vmatprep.mubr.bf16.mxu0 0
        %1363 = vmatmul.mubr.bf16.gmra.mrb[0].mxu0 %v778
        %v1364 = vpop.f32.mrb[0].mxu0
        %v1365 = vadd.f32 0.0, %v1364
        %v1366 = vpop.f32.mrb[0].mxu0
        %v1367 = vpop.f32.mrb[0].mxu0
        %v1368 = vadd.f32 0.0, %v1367
        %v1369 = vpop.f32.mrb[0].mxu0
        %1370 = vmatprep.mubr.bf16.mxu0 0
        %1371 = vmatmul.mubr.bf16.gmra.mrb[0].mxu0 %v779
        %v1372 = vpop.f32.mrb[0].mxu0
        %v1373 = vadd.f32 0.0, %v1372
        %v1374 = vpop.f32.mrb[0].mxu0
        %v1375 = vpop.f32.mrb[0].mxu0
        %v1376 = vadd.f32 0.0, %v1375
        %v1377 = vpop.f32.mrb[0].mxu0
        %1378 = vmatprep.mubr.bf16.mxu0 0
        %1379 = vmatmul.mubr.bf16.gmra.mrb[0].mxu0 %v780
        %v1380 = vpop.f32.mrb[0].mxu0
        %v1381 = vadd.f32 0.0, %v1380
        %v1382 = vpop.f32.mrb[0].mxu0
        %v1383 = vpop.f32.mrb[0].mxu0
        %v1384 = vadd.f32 0.0, %v1383
        %v1385 = vpop.f32.mrb[0].mxu0
        %1386 = vmatprep.mubr.bf16.mxu0 0
        %1387 = vmatmul.mubr.bf16.gmra.mrb[0].mxu0 %v781
        %v1388 = vpop.f32.mrb[0].mxu0
        %v1389 = vadd.f32 0.0, %v1388
        %v1390 = vpop.f32.mrb[0].mxu0
        %v1391 = vpop.f32.mrb[0].mxu0
        %v1392 = vadd.f32 0.0, %v1391
        %v1393 = vpop.f32.mrb[0].mxu0
        %1394 = vmatprep.mubr.bf16.mxu0 0
        %1395 = vmatmul.mubr.bf16.gmra.mrb[0].mxu0 %v782
        %v1396 = vpop.f32.mrb[0].mxu0
        %v1397 = vadd.f32 0.0, %v1396
        %v1398 = vpop.f32.mrb[0].mxu0
        %v1399 = vpop.f32.mrb[0].mxu0
        %v1400 = vadd.f32 0.0, %v1399
        %v1401 = vpop.f32.mrb[0].mxu0
        %1402 = vmatprep.mubr.bf16.mxu0 0
        %1403 = vmatmul.mubr.bf16.gmra.mrb[0].mxu0 %v783
        %v1404 = vpop.f32.mrb[0].mxu0
        %v1405 = vadd.f32 0.0, %v1404
        %v1406 = vpop.f32.mrb[0].mxu0
        %v1407 = vpop.f32.mrb[0].mxu0
        %v1408 = vadd.f32 0.0, %v1407
        %v1409 = vpop.f32.mrb[0].mxu0
        %1410 = vmatprep.mubr.bf16.mxu0 0
        %1411 = vmatmul.mubr.bf16.gmra.mrb[0].mxu0 %v784
        %v1412 = vpop.f32.mrb[0].mxu0
        %v1413 = vadd.f32 0.0, %v1412
        %v1414 = vpop.f32.mrb[0].mxu0
        %v1415 = vpop.f32.mrb[0].mxu0
        %v1416 = vadd.f32 0.0, %v1415
        %v1417 = vpop.f32.mrb[0].mxu0
        %1418 = vdwg.mxu0
        %v1419 = vmax.f32 %v1357, 0.0
        %v1420 = vmax.f32 %v1360, 0.0
        %v1421 = vmax.f32 %v1365, 0.0
        %v1422 = vmax.f32 %v1368, 0.0
        %v1423 = vmax.f32 %v1373, 0.0
        %v1424 = vmax.f32 %v1376, 0.0
        %v1425 = vmax.f32 %v1381, 0.0
        %v1426 = vmax.f32 %v1384, 0.0
        %v1427 = vmax.f32 %v1389, 0.0
        %v1428 = vmax.f32 %v1392, 0.0
        %v1429 = vmax.f32 %v1397, 0.0
        %v1430 = vmax.f32 %v1400, 0.0
        %v1431 = vmax.f32 %v1405, 0.0
        %v1432 = vmax.f32 %v1408, 0.0
        %v1433 = vmax.f32 %v1413, 0.0
        %v1434 = vmax.f32 %v1416, 0.0
        %v1435 = vpack.c.bf16 %v1420, %v1419
        %v1436 = vpack.c.bf16 %v1422, %v1421
        %v1437 = vpack.c.bf16 %v1424, %v1423
        %v1438 = vpack.c.bf16 %v1426, %v1425
        %v1439 = vpack.c.bf16 %v1428, %v1427
        %v1440 = vpack.c.bf16 %v1430, %v1429
        %v1441 = vpack.c.bf16 %v1432, %v1431
        %v1442 = vpack.c.bf16 %v1434, %v1433
        %v1443 = vld [vmem:[#allocation12] sm:$0xf]
        %v1444 = vld [vmem:[#allocation12 + $0x4] sm:$0xf]
        %v1445 = vld [vmem:[#allocation12 + $0x8] sm:$0xf]
        %v1446 = vld [vmem:[#allocation12 + $0xc] sm:$0xf]
        %v1447 = vld [vmem:[#allocation12 + $0x10] sm:$0xf]
        %v1448 = vld [vmem:[#allocation12 + $0x14] sm:$0xf]
        %v1449 = vld [vmem:[#allocation12 + $0x18] sm:$0xf]
        %v1450 = vld [vmem:[#allocation12 + $0x1c] sm:$0xf]
        %v1451 = vld [vmem:[#allocation12 + $0x20] sm:$0xf]
        %v1452 = vld [vmem:[#allocation12 + $0x24] sm:$0xf]
        %v1453 = vld [vmem:[#allocation12 + $0x28] sm:$0xf]
        %v1454 = vld [vmem:[#allocation12 + $0x2c] sm:$0xf]
        %v1455 = vld [vmem:[#allocation12 + $0x30] sm:$0xf]
        %v1456 = vld [vmem:[#allocation12 + $0x34] sm:$0xf]
        %v1457 = vld [vmem:[#allocation12 + $0x38] sm:$0xf]
        %v1458 = vld [vmem:[#allocation12 + $0x3c] sm:$0xf]
        %v1459 = vld [vmem:[%s8] sm:$0x1]
        %v1461 = vlaneseq
        %v1462 = vshrl.u32 %v1461, 7
        %v1463 = vsub.s32 0, %v1462
        %v1464 = vrot.slane %v1459, %v1463
        %v1482 = vunpack.c.l.b16 %v1443
        %v1483 = vunpack.c.l.b16 %v1444
        %v1484 = vunpack.c.l.b16 %v1445
        %v1485 = vunpack.c.l.b16 %v1446
        %v1486 = vunpack.c.l.b16 %v1447
        %v1487 = vunpack.c.l.b16 %v1448
        %v1488 = vunpack.c.l.b16 %v1449
        %v1489 = vunpack.c.l.b16 %v1450
        %v1490 = vunpack.c.l.b16 %v1451
        %v1491 = vunpack.c.l.b16 %v1452
        %v1492 = vunpack.c.l.b16 %v1453
        %v1493 = vunpack.c.l.b16 %v1454
        %v1494 = vunpack.c.l.b16 %v1455
        %v1495 = vunpack.c.l.b16 %v1456
        %v1496 = vunpack.c.l.b16 %v1457
        %v1497 = vunpack.c.l.b16 %v1458
        %v1498 = vpack.c.b16 %v1483, %v1482
        %v1499 = vpack.c.b16 %v1485, %v1484
        %v1500 = vpack.c.b16 %v1487, %v1486
        %v1501 = vpack.c.b16 %v1489, %v1488
        %v1502 = vpack.c.b16 %v1491, %v1490
        %v1503 = vpack.c.b16 %v1493, %v1492
        %v1504 = vpack.c.b16 %v1495, %v1494
        %v1505 = vpack.c.b16 %v1497, %v1496
        %1514 = vmatprep.subr.bf16.mxu0 0
        %1515 = vmatpush1.bf16.msra.mxu0 %v1498
        %1516 = vmatprep.subr.bf16.mxu0 0
        %1517 = vmatpush1.bf16.msra.mxu0 %v1499
        %1518 = vmatprep.subr.bf16.mxu0 0
        %1519 = vmatpush1.bf16.msra.mxu0 %v1500
        %1520 = vmatprep.subr.bf16.mxu0 0
        %1521 = vmatpush1.bf16.msra.mxu0 %v1501
        %1522 = vmatprep.subr.bf16.mxu0 0
        %1523 = vmatpush1.bf16.msra.mxu0 %v1502
        %1524 = vmatprep.subr.bf16.mxu0 0
        %1525 = vmatpush1.bf16.msra.mxu0 %v1503
        %1526 = vmatprep.subr.bf16.mxu0 0
        %1527 = vmatpush1.bf16.msra.mxu0 %v1504
        %1528 = vmatprep.subr.bf16.mxu0 0
        %1529 = vmatpush1.bf16.msra.mxu0 %v1505
        %1530 = vmatprep.subr.bf16.mxu0 0
        %1531 = vmatpush1.bf16.msra.mxu0 0
        %1532 = vmatprep.subr.bf16.mxu0 0
        %1533 = vmatpush1.bf16.msra.mxu0 0
        %1534 = vmatprep.subr.bf16.mxu0 0
        %1535 = vmatpush1.bf16.msra.mxu0 0
        %1536 = vmatprep.subr.bf16.mxu0 0
        %1537 = vmatpush1.bf16.msra.mxu0 0
        %1538 = vmatprep.subr.bf16.mxu0 0
        %1539 = vmatpush1.bf16.msra.mxu0 0
        %1540 = vmatprep.subr.bf16.mxu0 0
        %1541 = vmatpush1.bf16.msra.mxu0 0
        %1542 = vmatprep.subr.bf16.mxu0 0
        %1543 = vmatpush1.bf16.msra.mxu0 0
        %1544 = vmatprep.subr.bf16.mxu0 0
        %1545 = vmatpush1.bf16.msra.mxu0 0
        %1546 = vmatprep.mubr.bf16.mxu0 0
        %1547 = vmatmul.mubr.bf16.gmra.mrb[0].mxu0 %v1435
        %v1548 = vpop.f32.mrb[0].mxu0
        %v1549 = vadd.f32 %v1464, %v1548
        %v1550 = vpop.f32.mrb[0].mxu0
        %v1551 = vpop.f32.mrb[0].mxu0
        %v1552 = vadd.f32 %v1464, %v1551
        %v1553 = vpop.f32.mrb[0].mxu0
        %1554 = vmatprep.mubr.bf16.mxu0 0
        %1555 = vmatmul.mubr.bf16.gmra.mrb[0].mxu0 %v1436
        %v1556 = vpop.f32.mrb[0].mxu0
        %v1557 = vadd.f32 %v1464, %v1556
        %v1558 = vpop.f32.mrb[0].mxu0
        %v1559 = vpop.f32.mrb[0].mxu0
        %v1560 = vadd.f32 %v1464, %v1559
        %v1561 = vpop.f32.mrb[0].mxu0
        %1562 = vmatprep.mubr.bf16.mxu0 0
        %1563 = vmatmul.mubr.bf16.gmra.mrb[0].mxu0 %v1437
        %v1564 = vpop.f32.mrb[0].mxu0
        %v1565 = vadd.f32 %v1464, %v1564
        %v1566 = vpop.f32.mrb[0].mxu0
        %v1567 = vpop.f32.mrb[0].mxu0
        %v1568 = vadd.f32 %v1464, %v1567
        %v1569 = vpop.f32.mrb[0].mxu0
        %1570 = vmatprep.mubr.bf16.mxu0 0
        %1571 = vmatmul.mubr.bf16.gmra.mrb[0].mxu0 %v1438
        %v1572 = vpop.f32.mrb[0].mxu0
        %v1573 = vadd.f32 %v1464, %v1572
        %v1574 = vpop.f32.mrb[0].mxu0
        %v1575 = vpop.f32.mrb[0].mxu0
        %v1576 = vadd.f32 %v1464, %v1575
        %v1577 = vpop.f32.mrb[0].mxu0
        %1578 = vmatprep.mubr.bf16.mxu0 0
        %1579 = vmatmul.mubr.bf16.gmra.mrb[0].mxu0 %v1439
        %v1580 = vpop.f32.mrb[0].mxu0
        %v1581 = vadd.f32 %v1464, %v1580
        %v1582 = vpop.f32.mrb[0].mxu0
        %v1583 = vpop.f32.mrb[0].mxu0
        %v1584 = vadd.f32 %v1464, %v1583
        %v1585 = vpop.f32.mrb[0].mxu0
        %1586 = vmatprep.mubr.bf16.mxu0 0
        %1587 = vmatmul.mubr.bf16.gmra.mrb[0].mxu0 %v1440
        %v1588 = vpop.f32.mrb[0].mxu0
        %v1589 = vadd.f32 %v1464, %v1588
        %v1590 = vpop.f32.mrb[0].mxu0
        %v1591 = vpop.f32.mrb[0].mxu0
        %v1592 = vadd.f32 %v1464, %v1591
        %v1593 = vpop.f32.mrb[0].mxu0
        %1594 = vmatprep.mubr.bf16.mxu0 0
        %1595 = vmatmul.mubr.bf16.gmra.mrb[0].mxu0 %v1441
        %v1596 = vpop.f32.mrb[0].mxu0
        %v1597 = vadd.f32 %v1464, %v1596
        %v1598 = vpop.f32.mrb[0].mxu0
        %v1599 = vpop.f32.mrb[0].mxu0
        %v1600 = vadd.f32 %v1464, %v1599
        %v1601 = vpop.f32.mrb[0].mxu0
        %1602 = vmatprep.mubr.bf16.mxu0 0
        %1603 = vmatmul.mubr.bf16.gmra.mrb[0].mxu0 %v1442
        %v1604 = vpop.f32.mrb[0].mxu0
        %v1605 = vadd.f32 %v1464, %v1604
        %v1606 = vpop.f32.mrb[0].mxu0
        %v1607 = vpop.f32.mrb[0].mxu0
        %v1608 = vadd.f32 %v1464, %v1607
        %v1609 = vpop.f32.mrb[0].mxu0
        %1610 = vdwg.mxu0
        %vm1611 = vcmp.lt.s32.totalorder %v484, 4
        %v1612 = vsel %vm1611, %v1549, -1e+30
        %v1613 = vsel %vm1611, %v1552, -1e+30
        %v1614 = vsel %vm1611, %v1557, -1e+30
        %v1615 = vsel %vm1611, %v1560, -1e+30
        %v1616 = vsel %vm1611, %v1565, -1e+30
        %v1617 = vsel %vm1611, %v1568, -1e+30
        %v1618 = vsel %vm1611, %v1573, -1e+30
        %v1619 = vsel %vm1611, %v1576, -1e+30
        %v1620 = vsel %vm1611, %v1581, -1e+30
        %v1621 = vsel %vm1611, %v1584, -1e+30
        %v1622 = vsel %vm1611, %v1589, -1e+30
        %v1623 = vsel %vm1611, %v1592, -1e+30
        %v1624 = vsel %vm1611, %v1597, -1e+30
        %v1625 = vsel %vm1611, %v1600, -1e+30
        %v1626 = vsel %vm1611, %v1605, -1e+30
        %v1627 = vsel %vm1611, %v1608, -1e+30
        %1628 = vmax.xlane.f32.xlu0 %v1612
        %v1629 = vpop.xlane.xlu0 %1628
        %1630 = vmax.xlane.f32.xlu0 %v1613
        %v1631 = vpop.xlane.xlu0 %1630
        %1632 = vmax.xlane.f32.xlu0 %v1614
        %v1633 = vpop.xlane.xlu0 %1632
        %1634 = vmax.xlane.f32.xlu0 %v1615
        %v1635 = vpop.xlane.xlu0 %1634
        %1636 = vmax.xlane.f32.xlu0 %v1616
        %v1637 = vpop.xlane.xlu0 %1636
        %1638 = vmax.xlane.f32.xlu0 %v1617
        %v1639 = vpop.xlane.xlu0 %1638
        %1640 = vmax.xlane.f32.xlu0 %v1618
        %v1641 = vpop.xlane.xlu0 %1640
        %1642 = vmax.xlane.f32.xlu0 %v1619
        %v1643 = vpop.xlane.xlu0 %1642
        %1644 = vmax.xlane.f32.xlu0 %v1620
        %v1645 = vpop.xlane.xlu0 %1644
        %1646 = vmax.xlane.f32.xlu0 %v1621
        %v1647 = vpop.xlane.xlu0 %1646
        %1648 = vmax.xlane.f32.xlu0 %v1622
        %v1649 = vpop.xlane.xlu0 %1648
        %1650 = vmax.xlane.f32.xlu0 %v1623
        %v1651 = vpop.xlane.xlu0 %1650
        %1652 = vmax.xlane.f32.xlu0 %v1624
        %v1653 = vpop.xlane.xlu0 %1652
        %1654 = vmax.xlane.f32.xlu0 %v1625
        %v1655 = vpop.xlane.xlu0 %1654
        %1656 = vmax.xlane.f32.xlu0 %v1626
        %v1657 = vpop.xlane.xlu0 %1656
        %1658 = vmax.xlane.f32.xlu0 %v1627
        %v1659 = vpop.xlane.xlu0 %1658
        %v1660 = vsub.f32 %v1612, %v1629
        %v1661 = vsub.f32 %v1613, %v1631
        %v1662 = vsub.f32 %v1614, %v1633
        %v1663 = vsub.f32 %v1615, %v1635
        %v1664 = vsub.f32 %v1616, %v1637
        %v1665 = vsub.f32 %v1617, %v1639
        %v1666 = vsub.f32 %v1618, %v1641
        %v1667 = vsub.f32 %v1619, %v1643
        %v1668 = vsub.f32 %v1620, %v1645
        %v1669 = vsub.f32 %v1621, %v1647
        %v1670 = vsub.f32 %v1622, %v1649
        %v1671 = vsub.f32 %v1623, %v1651
        %v1672 = vsub.f32 %v1624, %v1653
        %v1673 = vsub.f32 %v1625, %v1655
        %v1674 = vsub.f32 %v1626, %v1657
        %v1675 = vsub.f32 %v1627, %v1659
        %v1676 = vmul.f32 %v1660, 1.442695
        %v1677 = vpow.pop %v1676
        %v1678 = vmul.f32 %v1661, 1.442695
        %v1679 = vpow.pop %v1678
        %v1680 = vmul.f32 %v1662, 1.442695
        %v1681 = vpow.pop %v1680
        %v1682 = vmul.f32 %v1663, 1.442695
        %v1683 = vpow.pop %v1682
        %v1684 = vmul.f32 %v1664, 1.442695
        %v1685 = vpow.pop %v1684
        %v1686 = vmul.f32 %v1665, 1.442695
        %v1687 = vpow.pop %v1686
        %v1688 = vmul.f32 %v1666, 1.442695
        %v1689 = vpow.pop %v1688
        %v1690 = vmul.f32 %v1667, 1.442695
        %v1691 = vpow.pop %v1690
        %v1692 = vmul.f32 %v1668, 1.442695
        %v1693 = vpow.pop %v1692
        %v1694 = vmul.f32 %v1669, 1.442695
        %v1695 = vpow.pop %v1694
        %v1696 = vmul.f32 %v1670, 1.442695
        %v1697 = vpow.pop %v1696
        %v1698 = vmul.f32 %v1671, 1.442695
        %v1699 = vpow.pop %v1698
        %v1700 = vmul.f32 %v1672, 1.442695
        %v1701 = vpow.pop %v1700
        %v1702 = vmul.f32 %v1673, 1.442695
        %v1703 = vpow.pop %v1702
        %v1704 = vmul.f32 %v1674, 1.442695
        %v1705 = vpow.pop %v1704
        %v1706 = vmul.f32 %v1675, 1.442695
        %v1707 = vpow.pop %v1706
        %1708 = vadd.xlane.f32.xlu0 %v1677
        %v1709 = vpop.xlane.xlu0 %1708
        %1710 = vadd.xlane.f32.xlu0 %v1679
        %v1711 = vpop.xlane.xlu0 %1710
        %1712 = vadd.xlane.f32.xlu0 %v1681
        %v1713 = vpop.xlane.xlu0 %1712
        %1714 = vadd.xlane.f32.xlu0 %v1683
        %v1715 = vpop.xlane.xlu0 %1714
        %1716 = vadd.xlane.f32.xlu0 %v1685
        %v1717 = vpop.xlane.xlu0 %1716
        %1718 = vadd.xlane.f32.xlu0 %v1687
        %v1719 = vpop.xlane.xlu0 %1718
        %1720 = vadd.xlane.f32.xlu0 %v1689
        %v1721 = vpop.xlane.xlu0 %1720
        %1722 = vadd.xlane.f32.xlu0 %v1691
        %v1723 = vpop.xlane.xlu0 %1722
        %1724 = vadd.xlane.f32.xlu0 %v1693
        %v1725 = vpop.xlane.xlu0 %1724
        %1726 = vadd.xlane.f32.xlu0 %v1695
        %v1727 = vpop.xlane.xlu0 %1726
        %1728 = vadd.xlane.f32.xlu0 %v1697
        %v1729 = vpop.xlane.xlu0 %1728
        %1730 = vadd.xlane.f32.xlu0 %v1699
        %v1731 = vpop.xlane.xlu0 %1730
        %1732 = vadd.xlane.f32.xlu0 %v1701
        %v1733 = vpop.xlane.xlu0 %1732
        %1734 = vadd.xlane.f32.xlu0 %v1703
        %v1735 = vpop.xlane.xlu0 %1734
        %1736 = vadd.xlane.f32.xlu0 %v1705
        %v1737 = vpop.xlane.xlu0 %1736
        %1738 = vadd.xlane.f32.xlu0 %v1707
        %v1739 = vpop.xlane.xlu0 %1738
        %v1740 = vlog2.pop %v1709
        %v1741 = vmul.f32 %v1740, 0.6931472
        %v1742 = vlog2.pop %v1711
        %v1743 = vmul.f32 %v1742, 0.6931472
        %v1744 = vlog2.pop %v1713
        %v1745 = vmul.f32 %v1744, 0.6931472
        %v1746 = vlog2.pop %v1715
        %v1747 = vmul.f32 %v1746, 0.6931472
        %v1748 = vlog2.pop %v1717
        %v1749 = vmul.f32 %v1748, 0.6931472
        %v1750 = vlog2.pop %v1719
        %v1751 = vmul.f32 %v1750, 0.6931472
        %v1752 = vlog2.pop %v1721
        %v1753 = vmul.f32 %v1752, 0.6931472
        %v1754 = vlog2.pop %v1723
        %v1755 = vmul.f32 %v1754, 0.6931472
        %v1756 = vlog2.pop %v1725
        %v1757 = vmul.f32 %v1756, 0.6931472
        %v1758 = vlog2.pop %v1727
        %v1759 = vmul.f32 %v1758, 0.6931472
        %v1760 = vlog2.pop %v1729
        %v1761 = vmul.f32 %v1760, 0.6931472
        %v1762 = vlog2.pop %v1731
        %v1763 = vmul.f32 %v1762, 0.6931472
        %v1764 = vlog2.pop %v1733
        %v1765 = vmul.f32 %v1764, 0.6931472
        %v1766 = vlog2.pop %v1735
        %v1767 = vmul.f32 %v1766, 0.6931472
        %v1768 = vlog2.pop %v1737
        %v1769 = vmul.f32 %v1768, 0.6931472
        %v1770 = vlog2.pop %v1739
        %v1771 = vmul.f32 %v1770, 0.6931472
        %v1772 = vsub.f32 %v1660, %v1741
        %v1773 = vsub.f32 %v1661, %v1743
        %v1774 = vsub.f32 %v1662, %v1745
        %v1775 = vsub.f32 %v1663, %v1747
        %v1776 = vsub.f32 %v1664, %v1749
        %v1777 = vsub.f32 %v1665, %v1751
        %v1778 = vsub.f32 %v1666, %v1753
        %v1779 = vsub.f32 %v1667, %v1755
        %v1780 = vsub.f32 %v1668, %v1757
        %v1781 = vsub.f32 %v1669, %v1759
        %v1782 = vsub.f32 %v1670, %v1761
        %v1783 = vsub.f32 %v1671, %v1763
        %v1784 = vsub.f32 %v1672, %v1765
        %v1785 = vsub.f32 %v1673, %v1767
        %v1786 = vsub.f32 %v1674, %v1769
        %v1787 = vsub.f32 %v1675, %v1771
        %1788 = vst [vmem:[%s445] sm:$0xff] %v1772
        %1789 = vst [vmem:[%s445 + $0x8] sm:$0xff] %v1773
        %1790 = vst [vmem:[%s445 + $0x10] sm:$0xff] %v1774
        %1791 = vst [vmem:[%s445 + $0x18] sm:$0xff] %v1775
        %1792 = vst [vmem:[%s445 + $0x20] sm:$0xff] %v1776
        %1793 = vst [vmem:[%s445 + $0x28] sm:$0xff] %v1777
        %1794 = vst [vmem:[%s445 + $0x30] sm:$0xff] %v1778
        %1795 = vst [vmem:[%s445 + $0x38] sm:$0xff] %v1779
        %1796 = vst [vmem:[%s445 + $0x40] sm:$0xff] %v1780
        %1797 = vst [vmem:[%s445 + $0x48] sm:$0xff] %v1781
        %1798 = vst [vmem:[%s445 + $0x50] sm:$0xff] %v1782
        %1799 = vst [vmem:[%s445 + $0x58] sm:$0xff] %v1783
        %1800 = vst [vmem:[%s445 + $0x60] sm:$0xff] %v1784
        %1801 = vst [vmem:[%s445 + $0x68] sm:$0xff] %v1785
        %1802 = vst [vmem:[%s445 + $0x70] sm:$0xff] %v1786
        %1803 = vst [vmem:[%s445 + $0x78] sm:$0xff] %v1787
        %s1804 = sand.u32 %s238, 1
        %s1805 = scalar_lea.sflag [#allocation4], %s1804
        %s1806 = sand.u32 %s238, 1
        %s1807 = smul.addr %s1806, 128
        %s1808 = scalar_lea.vmem [#allocation13], %s1807
        // Predicated region
        $region81: #{tpu_custom_call.1} parent=55 // pred_check
          %p1809 = pneg %p248
        $region82: #{tpu_custom_call.1} parent=55 // pred_check_branch
          %1811 = sbr.rel (%p1809) target = $region84
        $region83: #{tpu_custom_call.1} parent=55 // pred_region
          %s1813 = ssub.s32 2048, 2048
          %1814 = vsyncadd %s1805, %s1813
          %s1815 = smul.addr %s31, 16
          %s1816 = smul.addr %s1815, 128
          %s1817 = scalar_lea.hbm %s9, %s1816
          %s1818 = sshll.u32 %s1808, 4
          %s1819 = int_to_ptr.vmem [resolvable:$true] %s1818
          %1824 = dma.vmem_to_hbm [thread:$0]  %s1819, 2048, %s1817, %s1805, 128, 128, 8
        $region84: #{tpu_custom_call.1} parent=55 // pred_fallthru
          _
      $region56: #{tpu_custom_call.1} parent=5 // pred_fallthru
        _
      %p1825 = scmp.le.s32.totalorder 2, %s26
      // Predicated region
      $region85: #{tpu_custom_call.1} parent=5 // pred_check
        %p1826 = pneg %p1825
      $region86: #{tpu_custom_call.1} parent=5 // pred_check_branch
        %1828 = sbr.rel (%p1826) target = $region88
      $region87: #{tpu_custom_call.1} parent=5 // pred_region
        %s1829 = ssub.s32 %s26, 2
        // Predicated region
        $region89: #{tpu_custom_call.1} parent=87 // pred_check
          %p1830 = pneg %p254
        $region90: #{tpu_custom_call.1} parent=87 // pred_check_branch
          %1832 = sbr.rel (%p1830) target = $region92
        $region91: #{tpu_custom_call.1} parent=87 // pred_region
          %s1833 = sand.u32 %s239, 1
          %s1834 = scalar_lea.sflag [#allocation4], %s1833
          %s1835 = sand.u32 %s239, 1
          %s1836 = smul.addr %s1835, 128
          %s1837 = scalar_lea.vmem [#allocation13], %s1836
          %1838 = dma.done %s1834, 2048
        $region92: #{tpu_custom_call.1} parent=87 // pred_fallthru
          _
      $region88: #{tpu_custom_call.1} parent=5 // pred_fallthru
        _
    $region6: #{tpu_custom_call.1} parent=1 // loop_footer
      %s30 = sadd.s32 1, %s26
    $region7: #{tpu_custom_call.1} parent=1 // loop_footer_branch
      %25 = sbr.rel target = $region3
    $region8: #{tpu_custom_call.1} parent=1 // loop_exit
      _
    %1839 = vsyncpa [#allocation3], 1
    %s1840 = scalar_lea.sflag [#allocation3], 1
    %1841 = vsyncpa %s1840, 1
    %1842 = vsyncpa [#allocation8], 1
    %s1843 = scalar_lea.sflag [#allocation8], 1
    %1844 = vsyncpa %s1843, 1
    %1845 = vsyncpa [#allocation11], 1
    %1846 = vsyncpa [#allocation4], 1
    %s1847 = scalar_lea.sflag [#allocation4], 1
    %1848 = vsyncpa %s1847, 1
    %1849 = vsyncpa [#allocation5], 1
    %s1850 = scalar_lea.sflag [#allocation5], 1
    %1851 = vsyncpa %s1850, 1

</llo_original>
